<compile_context>
chip_gen: v5e
topology: v5e:2x2
jax: 0.10.0
libtpu: 0.0.40
codegen_flags: <defaults>
</compile_context>

<pallas_src>
import math
import functools

import jax
import jax.numpy as jnp
from jax.experimental import pallas as pl
from jax.experimental.pallas import tpu as pltpu


# ----------------------------- in-kernel math helpers -----------------------------

def _layernorm(x, w, b, eps=1e-6):
    mu = jnp.mean(x, axis=-1, keepdims=True)
    xc = x - mu
    var = jnp.mean(xc * xc, axis=-1, keepdims=True)
    return xc * jax.lax.rsqrt(var + eps) * w + b


_SQRT_2_OVER_PI = math.sqrt(2.0 / math.pi)


def _gelu_tanh(x):
    # tanh lowers to the EUP slot (idle under the MXU).  Max abs deviation from the
    # exact erf-GELU is ~3e-3.
    # TODO(synk): switch to an exact-erf polynomial if tighter agreement with
    #             PyTorch's default nn.GELU() is required.
    return 0.5 * x * (1.0 + jnp.tanh(_SQRT_2_OVER_PI * (x + 0.044715 * x * x * x)))


# ----------------------------------- kernels --------------------------------------

def encoder_block_kernel(*refs, num_heads, add_pos, final_ln):
    """Grid = (B // Bb, n_mlp_tiles).

    m == 0      : attention branch for the whole (Bb, S, H) batch block; residual and
                  LN2 output cached in VMEM scratch.
    every step  : one mlp_dim tile, accumulated into an f32 VMEM accumulator.
    last step   : residual + bias (+ optional fused final LayerNorm) -> output block.
    """
    it = iter(refs)
    x_ref = next(it)
    pos_ref = next(it) if add_pos else None
    ln1_w_ref, ln1_b_ref = next(it), next(it)
    wqkv_ref, bqkv_ref = next(it), next(it)
    wo_ref, bo_ref = next(it), next(it)
    ln2_w_ref, ln2_b_ref = next(it), next(it)
    w1_ref, b1_ref = next(it), next(it)
    w2_ref, b2_ref = next(it), next(it)
    lnf_w_ref = lnf_b_ref = None
    if final_ln:
        lnf_w_ref, lnf_b_ref = next(it), next(it)
    o_ref = next(it)
    x2_scr, y2_scr, acc_scr = next(it), next(it), next(it)

    m_idx = pl.program_id(1)
    n_m = pl.num_programs(1)

    Bb, S, H = x_ref.shape
    nh = num_heads
    hd = H // nh
    scale = 1.0 / math.sqrt(hd)

    # ---- m == 0: attention + residual + LN2, cached in VMEM scratch ----
    @pl.when(m_idx == 0)
    def _attention():
        x = x_ref[...]                                    # (Bb, S, H) f32
        if add_pos:
            x = x + pos_ref[...]                          # fused pos add (dropout == id)
        x2d = x.reshape(Bb * S, H)

        y = _layernorm(x2d, ln1_w_ref[0], ln1_b_ref[0]).astype(jnp.bfloat16)

        # Fused QKV projection: single full-width (H, 3H) matmul.
        qkv = jnp.dot(y, wqkv_ref[...],
                      preferred_element_type=jnp.float32) + bqkv_ref[0]   # (Bb*S, 3H)
        qkv3 = qkv.reshape(Bb, S, 3 * H)

        # Per-head scores/context: 3-D matmuls with a single leading batch dim (Bb).
        ctx_heads = []
        for h in range(nh):
            qh = (qkv3[:, :, h * hd:(h + 1) * hd] * scale).astype(jnp.bfloat16)
            kh = qkv3[:, :, H + h * hd:H + (h + 1) * hd].astype(jnp.bfloat16)
            vh = qkv3[:, :, 2 * H + h * hd:2 * H + (h + 1) * hd].astype(jnp.bfloat16)

            s = jax.lax.dot_general(qh, kh, (((2,), (2,)), ((0,), (0,))),
                                    preferred_element_type=jnp.float32)    # (Bb,S,S)
            s = s - jnp.max(s, axis=-1, keepdims=True)
            e = jnp.exp(s)
            pr = e * pl.reciprocal(jnp.sum(e, axis=-1, keepdims=True), approx=True)

            ctx_h = jax.lax.dot_general(pr.astype(jnp.bfloat16), vh,
                                        (((2,), (1,)), ((0,), (0,))),
                                        preferred_element_type=jnp.float32)  # (Bb,S,hd)
            ctx_heads.append(ctx_h.astype(jnp.bfloat16))

        ctx = jnp.concatenate(ctx_heads, axis=-1).reshape(Bb * S, H)        # bf16

        # Output projection: single matmul with full K = H fill.
        attn = jnp.dot(ctx, wo_ref[...],
                       preferred_element_type=jnp.float32) + bo_ref[0]     # (Bb*S, H)

        x2 = x2d + attn                                   # dropout == identity
        x2_scr[...] = x2
        y2_scr[...] = _layernorm(x2, ln2_w_ref[0], ln2_b_ref[0]).astype(jnp.bfloat16)

    # ---- every step: one mlp_dim tile, accumulated in f32 scratch ----
    h1 = jnp.dot(y2_scr[...], w1_ref[...],
                 preferred_element_type=jnp.float32) + b1_ref[0]            # (Bb*S, tm)
    g = _gelu_tanh(h1).astype(jnp.bfloat16)
    part = jnp.dot(g, w2_ref[...], preferred_element_type=jnp.float32)      # (Bb*S, H)

    @pl.when(m_idx == 0)
    def _init_acc():
        acc_scr[...] = part

    @pl.when(m_idx > 0)
    def _accumulate():
        acc_scr[...] = acc_scr[...] + part

    # ---- last step: residual + bias, optional fused final LayerNorm, write output ----
    @pl.when(m_idx == n_m - 1)
    def _finalize():
        out = x2_scr[...] + acc_scr[...] + b2_ref[0]
        if final_ln:
            out = _layernorm(out, lnf_w_ref[0], lnf_b_ref[0])
        o_ref[...] = out.reshape(Bb, S, H).astype(o_ref.dtype)


def _pos_ln_kernel(x_ref, pos_ref, w_ref, b_ref, o_ref):
    # Degenerate num_layers == 0 path: LN(x + pos).
    o_ref[0] = _layernorm(x_ref[0] + pos_ref[0], w_ref[0], b_ref[0])


# ----------------------------------- wrappers --------------------------------------

def _pick_mlp_tile(M):
    if M <= 1024:
        return M
    for cand in (1024, 768, 512, 384, 256, 128):
        if M % cand == 0:
            return cand
    return M


def _pick_batch_block(B, max_bb=8):
    # Prefer block sizes that leave an even (>=2) number of batch-axis grid steps so
    # both v7x TensorCores get work; otherwise take the largest divisor <= max_bb.
    best = 1
    for bb in range(min(B, max_bb), 0, -1):
        if B % bb == 0:
            if best == 1:
                best = bb
            if (B // bb) % 2 == 0:
                return bb
    return best


def encoder_block(x, pos, p, lnf_w, lnf_b, num_heads, *, add_pos, final_ln):
    B, S, H = x.shape
    M = p["w1"].shape[1]                     # w1 prepared as (H, M)
    tm = _pick_mlp_tile(M)
    n_m = M // tm
    Bb = _pick_batch_block(B)

    const2 = lambda b, m: (0, 0)

    in_specs = [pl.BlockSpec((Bb, S, H), lambda b, m: (b, 0, 0))]           # x
    args = [x]
    if add_pos:
        in_specs.append(pl.BlockSpec((1, S, H), lambda b, m: (0, 0, 0)))    # pos
        args.append(pos)
    in_specs += [
        pl.BlockSpec((1, H), const2), pl.BlockSpec((1, H), const2),         # ln1 w/b
        pl.BlockSpec((H, 3 * H), const2),                                   # wqkv
        pl.BlockSpec((1, 3 * H), const2),                                   # bqkv
        pl.BlockSpec((H, H), const2), pl.BlockSpec((1, H), const2),         # wo, bo
        pl.BlockSpec((1, H), const2), pl.BlockSpec((1, H), const2),         # ln2 w/b
        pl.BlockSpec((H, tm), lambda b, m: (0, m)),                         # w1 tile
        pl.BlockSpec((1, tm), lambda b, m: (0, m)),                         # b1 tile
        pl.BlockSpec((tm, H), lambda b, m: (m, 0)),                         # w2 tile
        pl.BlockSpec((1, H), const2),                                       # b2
    ]
    args += [p["ln1_w"], p["ln1_b"], p["wqkv"], p["bqkv"], p["wo"], p["bo"],
             p["ln2_w"], p["ln2_b"], p["w1"], p["b1"], p["w2"], p["b2"]]
    if final_ln:
        in_specs += [pl.BlockSpec((1, H), const2), pl.BlockSpec((1, H), const2)]
        args += [lnf_w, lnf_b]

    kernel = functools.partial(encoder_block_kernel, num_heads=num_heads,
                               add_pos=add_pos, final_ln=final_ln)

    return pl.pallas_call(
        kernel,
        out_shape=jax.ShapeDtypeStruct((B, S, H), x.dtype),
        grid=(B // Bb, n_m),
        in_specs=in_specs,
        out_specs=pl.BlockSpec((Bb, S, H), lambda b, m: (b, 0, 0)),
        scratch_shapes=[pltpu.VMEM((Bb * S, H), jnp.float32),     # x2 (attn residual)
                        pltpu.VMEM((Bb * S, H), jnp.bfloat16),    # LN2 output (bf16)
                        pltpu.VMEM((Bb * S, H), jnp.float32)],    # MLP f32 accumulator
        compiler_params=pltpu.CompilerParams(
            dimension_semantics=("parallel", "arbitrary"),
            vmem_limit_bytes=48 * 1024 * 1024),
    )(*args)


def _pos_ln(x, pos, w, b):
    B, S, H = x.shape
    return pl.pallas_call(
        _pos_ln_kernel,
        out_shape=jax.ShapeDtypeStruct((B, S, H), x.dtype),
        grid=(B,),
        in_specs=[pl.BlockSpec((1, S, H), lambda i: (i, 0, 0)),
                  pl.BlockSpec((1, S, H), lambda i: (0, 0, 0)),
                  pl.BlockSpec((1, H), lambda i: (0, 0)),
                  pl.BlockSpec((1, H), lambda i: (0, 0))],
        out_specs=pl.BlockSpec((1, S, H), lambda i: (i, 0, 0)),
        compiler_params=pltpu.CompilerParams(dimension_semantics=("parallel",)),
    )(x, pos, w, b)


def encoder_forward(x, prep, num_heads):
    layers = prep["layers"]
    if not layers:
        return _pos_ln(x, prep["pos"], prep["ln_w"], prep["ln_b"])
    n = len(layers)
    for i, p in enumerate(layers):
        x = encoder_block(x, prep["pos"], p, prep["ln_w"], prep["ln_b"], num_heads,
                          add_pos=(i == 0), final_ln=(i == n - 1))
    return x


# ------------------------------ parameter construction ------------------------------

def _xavier_uniform(key, shape):
    fan_out, fan_in = shape
    a = math.sqrt(6.0 / (fan_in + fan_out))
    return jax.random.uniform(key, shape, jnp.float32, -a, a)


def init_params(key, num_layers, seq, hidden, mlp_dim):
    """Parameters in PyTorch layout: Linear weights are (out_features, in_features)."""
    keys = jax.random.split(key, 1 + num_layers)
    params = {
        "pos": 0.02 * jax.random.normal(keys[0], (1, seq, hidden), jnp.float32),
        "ln_w": jnp.ones((1, hidden), jnp.float32),
        "ln_b": jnp.zeros((1, hidden), jnp.float32),
        "layers": [],
    }
    for li in range(num_layers):
        k = jax.random.split(keys[1 + li], 6)
        params["layers"].append({
            "ln1_w": jnp.ones((1, hidden), jnp.float32),
            "ln1_b": jnp.zeros((1, hidden), jnp.float32),
            "in_w": _xavier_uniform(k[0], (3 * hidden, hidden)),
            "in_b": jnp.zeros((1, 3 * hidden), jnp.float32),
            "out_w": _xavier_uniform(k[1], (hidden, hidden)),
            "out_b": jnp.zeros((1, hidden), jnp.float32),
            "ln2_w": jnp.ones((1, hidden), jnp.float32),
            "ln2_b": jnp.zeros((1, hidden), jnp.float32),
            "w1": _xavier_uniform(k[2], (mlp_dim, hidden)),
            "b1": 1e-6 * jax.random.normal(k[3], (1, mlp_dim), jnp.float32),
            "w2": _xavier_uniform(k[4], (hidden, mlp_dim)),
            "b2": 1e-6 * jax.random.normal(k[5], (1, hidden), jnp.float32),
        })
    return params


def prepare_params(params, num_heads):
    """One-time host-side re-layout: transpose Linear weights to (in, out) so the
    contraction dim is first and the output is lane-dense, keep the QKV projection
    fused as a single (H, 3H) weight, and cast matmul weights to bf16 (accumulation
    stays f32 inside the kernels)."""
    del num_heads  # head split now happens on the activations inside the kernel
    prep = {"pos": params["pos"], "ln_w": params["ln_w"], "ln_b": params["ln_b"],
            "layers": []}
    for p in params["layers"]:
        prep["layers"].append({
            "ln1_w": p["ln1_w"], "ln1_b": p["ln1_b"],
            "wqkv": p["in_w"].T.astype(jnp.bfloat16),    # (H, 3H), columns [q | k | v]
            "bqkv": p["in_b"],                           # (1, 3H)
            "wo": p["out_w"].T.astype(jnp.bfloat16),     # (H, H)
            "bo": p["out_b"],
            "ln2_w": p["ln2_w"], "ln2_b": p["ln2_b"],
            "w1": p["w1"].T.astype(jnp.bfloat16),        # (H, M)
            "b1": p["b1"],
            "w2": p["w2"].T.astype(jnp.bfloat16),        # (M, H)
            "b2": p["b2"],
        })
    return prep


# ------------------------------ pure-JAX reference ------------------------------

def _ref_encoder(x, params, num_heads):
    def ln(v, w, b):
        mu = jnp.mean(v, axis=-1, keepdims=True)
        var = jnp.mean((v - mu) ** 2, axis=-1, keepdims=True)
        return (v - mu) / jnp.sqrt(var + 1e-6) * w + b

    x = x + params["pos"]
    B, S, H = x.shape
    hd = H // num_heads
    for p in params["layers"]:
        y = ln(x, p["ln1_w"][0], p["ln1_b"][0])
        qkv = y @ p["in_w"].T + p["in_b"][0]
        q, k, v = qkv[..., :H], qkv[..., H:2 * H], qkv[..., 2 * H:]
        q = q.reshape(B, S, num_heads, hd).transpose(0, 2, 1, 3) / math.sqrt(hd)
        k = k.reshape(B, S, num_heads, hd).transpose(0, 2, 1, 3)
        v = v.reshape(B, S, num_heads, hd).transpose(0, 2, 1, 3)
        s = jnp.einsum("bhqd,bhkd->bhqk", q, k)
        a = jax.nn.softmax(s, axis=-1)
        o = jnp.einsum("bhqk,bhkd->bhqd", a, v).transpose(0, 2, 1, 3).reshape(B, S, H)
        o = o @ p["out_w"].T + p["out_b"][0]
        x2 = x + o
        y2 = ln(x2, p["ln2_w"][0], p["ln2_b"][0])
        h = jax.nn.gelu(y2 @ p["w1"].T + p["b1"][0], approximate=False)
        x = x2 + (h @ p["w2"].T + p["b2"][0])
    return ln(x, params["ln_w"][0], params["ln_b"][0])


# ----------------------------------------- main -----------------------------------------

if __name__ == "__main__":
    B, S, H, M, NUM_HEADS, NUM_LAYERS = 2, 8, 32, 64, 4, 2
    root = jax.random.PRNGKey(0)
    k_params, k_x = jax.random.split(root)
    params = init_params(k_params, NUM_LAYERS, S, H, M)
    x = jax.random.normal(k_x, (B, S, H), jnp.float32)

    prep = prepare_params(params, NUM_HEADS)
    out = encoder_forward(x, prep, NUM_HEADS)
    out = jax.block_until_ready(out)

    ref = _ref_encoder(x, params, NUM_HEADS)    # pure f32 / exact-GELU reference
    assert out.shape == (B, S, H)
    max_err = float(jnp.max(jnp.abs(out - ref)))
    # bf16 matmuls + tanh-GELU + approx reciprocal vs. the f32 exact reference.
    assert max_err < 7.5e-2, f"mismatch vs reference: {max_err}"
    print("KERNEL_OK")
</pallas_src>

<mosaic_0001>
module attributes {stable_mosaic.version = 11 : i64} {
  func.func @encoder_block_kernel(%arg0: i32, %arg1: i32, %arg2: memref<1x8x32xf32, #tpu.memory_space<vmem>>, %arg3: memref<1x8x32xf32, #tpu.memory_space<vmem>>, %arg4: memref<1x32xf32, #tpu.memory_space<vmem>>, %arg5: memref<1x32xf32, #tpu.memory_space<vmem>>, %arg6: memref<32x96xbf16, #tpu.memory_space<vmem>>, %arg7: memref<1x96xf32, #tpu.memory_space<vmem>>, %arg8: memref<32x32xbf16, #tpu.memory_space<vmem>>, %arg9: memref<1x32xf32, #tpu.memory_space<vmem>>, %arg10: memref<1x32xf32, #tpu.memory_space<vmem>>, %arg11: memref<1x32xf32, #tpu.memory_space<vmem>>, %arg12: memref<32x64xbf16, #tpu.memory_space<vmem>>, %arg13: memref<1x64xf32, #tpu.memory_space<vmem>>, %arg14: memref<64x32xbf16, #tpu.memory_space<vmem>>, %arg15: memref<1x32xf32, #tpu.memory_space<vmem>>, %arg16: memref<1x8x32xf32, #tpu.memory_space<vmem>>, %arg17: memref<8x32xf32, #tpu.memory_space<vmem>>, %arg18: memref<8x32xbf16, #tpu.memory_space<vmem>>, %arg19: memref<8x32xf32, #tpu.memory_space<vmem>>) attributes {dimension_semantics = [#tpu.dimension_semantics<parallel>, #tpu.dimension_semantics<arbitrary>], iteration_bounds = array<i64: 2, 1>, scalar_prefetch = 0 : i64, scratch_operands = 3 : i64, tpu.core_type = #tpu.core_type<tc>, window_params = [{transform_indices = @transform_0, window_bounds = array<i64: 1, 8, 32>}, {pipeline_mode = #tpu.pipeline_mode<synchronous>, transform_indices = @transform_1, window_bounds = array<i64: 1, 8, 32>}, {pipeline_mode = #tpu.pipeline_mode<synchronous>, transform_indices = @transform_2, window_bounds = array<i64: 1, 32>}, {pipeline_mode = #tpu.pipeline_mode<synchronous>, transform_indices = @transform_3, window_bounds = array<i64: 1, 32>}, {pipeline_mode = #tpu.pipeline_mode<synchronous>, transform_indices = @transform_4, window_bounds = array<i64: 32, 96>}, {pipeline_mode = #tpu.pipeline_mode<synchronous>, transform_indices = @transform_5, window_bounds = array<i64: 1, 96>}, {pipeline_mode = #tpu.pipeline_mode<synchronous>, transform_indices = @transform_6, window_bounds = array<i64: 32, 32>}, {pipeline_mode = #tpu.pipeline_mode<synchronous>, transform_indices = @transform_7, window_bounds = array<i64: 1, 32>}, {pipeline_mode = #tpu.pipeline_mode<synchronous>, transform_indices = @transform_8, window_bounds = array<i64: 1, 32>}, {pipeline_mode = #tpu.pipeline_mode<synchronous>, transform_indices = @transform_9, window_bounds = array<i64: 1, 32>}, {transform_indices = @transform_10, window_bounds = array<i64: 32, 64>}, {transform_indices = @transform_11, window_bounds = array<i64: 1, 64>}, {transform_indices = @transform_12, window_bounds = array<i64: 64, 32>}, {pipeline_mode = #tpu.pipeline_mode<synchronous>, transform_indices = @transform_13, window_bounds = array<i64: 1, 32>}, {transform_indices = @transform_14, window_bounds = array<i64: 1, 8, 32>}]} {
    %c0_i32 = arith.constant 0 : i32
    %0 = arith.cmpi eq, %arg1, %c0_i32 : i32
    %1 = arith.extui %0 : i1 to i32
    %c0_i32_0 = arith.constant 0 : i32
    %2 = arith.cmpi ne, %1, %c0_i32_0 : i32
    scf.if %2 {
      %c0_19 = arith.constant 0 : index
      %c0_20 = arith.constant 0 : index
      %c0_21 = arith.constant 0 : index
      %36 = vector.load %arg2[%c0_19, %c0_20, %c0_21] : memref<1x8x32xf32, #tpu.memory_space<vmem>>, vector<1x8x32xf32>
      %c0_22 = arith.constant 0 : index
      %c0_23 = arith.constant 0 : index
      %c0_24 = arith.constant 0 : index
      %37 = vector.load %arg3[%c0_22, %c0_23, %c0_24] : memref<1x8x32xf32, #tpu.memory_space<vmem>>, vector<1x8x32xf32>
      %38 = arith.addf %36, %37 : vector<1x8x32xf32>
      %39 = vector.shape_cast %38 : vector<1x8x32xf32> to vector<8x32xf32>
      %c0_25 = arith.constant 0 : index
      %c0_26 = arith.constant 0 : index
      %40 = vector.load %arg4[%c0_25, %c0_26] : memref<1x32xf32, #tpu.memory_space<vmem>>, vector<1x32xf32>
      %41 = vector.shape_cast %40 : vector<1x32xf32> to vector<32xf32>
      %c0_27 = arith.constant 0 : index
      %c0_28 = arith.constant 0 : index
      %42 = vector.load %arg5[%c0_27, %c0_28] : memref<1x32xf32, #tpu.memory_space<vmem>>, vector<1x32xf32>
      %43 = vector.shape_cast %42 : vector<1x32xf32> to vector<32xf32>
      %cst_29 = arith.constant dense<0.000000e+00> : vector<8xf32>
      %44 = vector.multi_reduction <add>, %39, %cst_29 [1] : vector<8x32xf32> to vector<8xf32>
      %45 = vector.shape_cast %44 : vector<8xf32> to vector<8x1xf32>
      %cst_30 = arith.constant 3.200000e+01 : f32
      %46 = vector.broadcast %cst_30 : f32 to vector<8x1xf32>
      %47 = arith.divf %45, %46 : vector<8x1xf32>
      %48 = vector.broadcast %47 : vector<8x1xf32> to vector<8x32xf32>
      %49 = arith.subf %39, %48 : vector<8x32xf32>
      %50 = arith.mulf %49, %49 : vector<8x32xf32>
      %cst_31 = arith.constant dense<0.000000e+00> : vector<8xf32>
      %51 = vector.multi_reduction <add>, %50, %cst_31 [1] : vector<8x32xf32> to vector<8xf32>
      %52 = vector.shape_cast %51 : vector<8xf32> to vector<8x1xf32>
      %cst_32 = arith.constant 3.200000e+01 : f32
      %53 = vector.broadcast %cst_32 : f32 to vector<8x1xf32>
      %54 = arith.divf %52, %53 : vector<8x1xf32>
      %cst_33 = arith.constant 9.99999997E-7 : f32
      %55 = vector.broadcast %cst_33 : f32 to vector<8x1xf32>
      %56 = arith.addf %54, %55 : vector<8x1xf32>
      %57 = math.rsqrt %56 : vector<8x1xf32>
      %58 = vector.broadcast %57 : vector<8x1xf32> to vector<8x32xf32>
      %59 = arith.mulf %49, %58 : vector<8x32xf32>
      %60 = vector.shape_cast %41 : vector<32xf32> to vector<1x32xf32>
      %61 = vector.broadcast %60 : vector<1x32xf32> to vector<8x32xf32>
      %62 = arith.mulf %59, %61 : vector<8x32xf32>
      %63 = vector.shape_cast %43 : vector<32xf32> to vector<1x32xf32>
      %64 = vector.broadcast %63 : vector<1x32xf32> to vector<8x32xf32>
      %65 = arith.addf %62, %64 : vector<8x32xf32>
      %66 = arith.truncf %65 : vector<8x32xf32> to vector<8x32xbf16>
      %c0_34 = arith.constant 0 : index
      %c0_35 = arith.constant 0 : index
      %67 = vector.load %arg6[%c0_34, %c0_35] : memref<32x96xbf16, #tpu.memory_space<vmem>>, vector<32x96xbf16>
      %cst_36 = arith.constant dense<0.000000e+00> : vector<8x96xf32>
      %68 = tpu.matmul %66, %67, %cst_36 {dimension_numbers = #tpu.dot_dimension_numbers<[1], [0], [0], [1], [0, 0, 1, 1], [], []>} : vector<8x32xbf16>, vector<32x96xbf16>, vector<8x96xf32> -> vector<8x96xf32>
      %c0_37 = arith.constant 0 : index
      %c0_38 = arith.constant 0 : index
      %69 = vector.load %arg7[%c0_37, %c0_38] : memref<1x96xf32, #tpu.memory_space<vmem>>, vector<1x96xf32>
      %70 = vector.shape_cast %69 : vector<1x96xf32> to vector<96xf32>
      %71 = vector.shape_cast %70 : vector<96xf32> to vector<1x96xf32>
      %72 = vector.broadcast %71 : vector<1x96xf32> to vector<8x96xf32>
      %73 = arith.addf %68, %72 : vector<8x96xf32>
      %74 = vector.shape_cast %73 : vector<8x96xf32> to vector<1x8x96xf32>
      %75 = vector.extract_strided_slice %74 {offsets = [0, 0, 0], sizes = [1, 8, 8], strides = [1, 1, 1]} : vector<1x8x96xf32> to vector<1x8x8xf32>
      %cst_39 = arith.constant 0.353553385 : f32
      %76 = vector.broadcast %cst_39 : f32 to vector<1x8x8xf32>
      %77 = arith.mulf %75, %76 : vector<1x8x8xf32>
      %78 = arith.truncf %77 : vector<1x8x8xf32> to vector<1x8x8xbf16>
      %79 = vector.extract_strided_slice %74 {offsets = [0, 0, 32], sizes = [1, 8, 8], strides = [1, 1, 1]} : vector<1x8x96xf32> to vector<1x8x8xf32>
      %80 = arith.truncf %79 : vector<1x8x8xf32> to vector<1x8x8xbf16>
      %81 = vector.extract_strided_slice %74 {offsets = [0, 0, 64], sizes = [1, 8, 8], strides = [1, 1, 1]} : vector<1x8x96xf32> to vector<1x8x8xf32>
      %82 = arith.truncf %81 : vector<1x8x8xf32> to vector<1x8x8xbf16>
      %cst_40 = arith.constant dense<0.000000e+00> : vector<1x8x8xf32>
      %83 = tpu.matmul %78, %80, %cst_40 {dimension_numbers = #tpu.dot_dimension_numbers<[2], [2], [1], [1], [0, 0, 0, 1, 1, 1], [0], [0]>} : vector<1x8x8xbf16>, vector<1x8x8xbf16>, vector<1x8x8xf32> -> vector<1x8x8xf32>
      %cst_41 = arith.constant dense<0xFF800000> : vector<1x8xf32>
      %84 = vector.multi_reduction <maximumf>, %83, %cst_41 [2] : vector<1x8x8xf32> to vector<1x8xf32>
      %85 = vector.shape_cast %84 : vector<1x8xf32> to vector<1x8x1xf32>
      %86 = vector.broadcast %85 : vector<1x8x1xf32> to vector<1x8x8xf32>
      %87 = arith.subf %83, %86 : vector<1x8x8xf32>
      %88 = math.exp %87 : vector<1x8x8xf32>
      %cst_42 = arith.constant dense<0.000000e+00> : vector<1x8xf32>
      %89 = vector.multi_reduction <add>, %88, %cst_42 [2] : vector<1x8x8xf32> to vector<1x8xf32>
      %90 = vector.shape_cast %89 : vector<1x8xf32> to vector<1x8x1xf32>
      %91 = tpu.reciprocal %90 {approx = true} : vector<1x8x1xf32> -> vector<1x8x1xf32>
      %92 = vector.broadcast %91 : vector<1x8x1xf32> to vector<1x8x8xf32>
      %93 = arith.mulf %88, %92 : vector<1x8x8xf32>
      %94 = arith.truncf %93 : vector<1x8x8xf32> to vector<1x8x8xbf16>
      %cst_43 = arith.constant dense<0.000000e+00> : vector<1x8x8xf32>
      %95 = tpu.matmul %94, %82, %cst_43 {dimension_numbers = #tpu.dot_dimension_numbers<[2], [1], [1], [2], [0, 0, 0, 1, 1, 2], [0], [0]>} : vector<1x8x8xbf16>, vector<1x8x8xbf16>, vector<1x8x8xf32> -> vector<1x8x8xf32>
      %96 = arith.truncf %95 : vector<1x8x8xf32> to vector<1x8x8xbf16>
      %97 = vector.extract_strided_slice %74 {offsets = [0, 0, 8], sizes = [1, 8, 8], strides = [1, 1, 1]} : vector<1x8x96xf32> to vector<1x8x8xf32>
      %cst_44 = arith.constant 0.353553385 : f32
      %98 = vector.broadcast %cst_44 : f32 to vector<1x8x8xf32>
      %99 = arith.mulf %97, %98 : vector<1x8x8xf32>
      %100 = arith.truncf %99 : vector<1x8x8xf32> to vector<1x8x8xbf16>
      %101 = vector.extract_strided_slice %74 {offsets = [0, 0, 40], sizes = [1, 8, 8], strides = [1, 1, 1]} : vector<1x8x96xf32> to vector<1x8x8xf32>
      %102 = arith.truncf %101 : vector<1x8x8xf32> to vector<1x8x8xbf16>
      %103 = vector.extract_strided_slice %74 {offsets = [0, 0, 72], sizes = [1, 8, 8], strides = [1, 1, 1]} : vector<1x8x96xf32> to vector<1x8x8xf32>
      %104 = arith.truncf %103 : vector<1x8x8xf32> to vector<1x8x8xbf16>
      %cst_45 = arith.constant dense<0.000000e+00> : vector<1x8x8xf32>
      %105 = tpu.matmul %100, %102, %cst_45 {dimension_numbers = #tpu.dot_dimension_numbers<[2], [2], [1], [1], [0, 0, 0, 1, 1, 1], [0], [0]>} : vector<1x8x8xbf16>, vector<1x8x8xbf16>, vector<1x8x8xf32> -> vector<1x8x8xf32>
      %cst_46 = arith.constant dense<0xFF800000> : vector<1x8xf32>
      %106 = vector.multi_reduction <maximumf>, %105, %cst_46 [2] : vector<1x8x8xf32> to vector<1x8xf32>
      %107 = vector.shape_cast %106 : vector<1x8xf32> to vector<1x8x1xf32>
      %108 = vector.broadcast %107 : vector<1x8x1xf32> to vector<1x8x8xf32>
      %109 = arith.subf %105, %108 : vector<1x8x8xf32>
      %110 = math.exp %109 : vector<1x8x8xf32>
      %cst_47 = arith.constant dense<0.000000e+00> : vector<1x8xf32>
      %111 = vector.multi_reduction <add>, %110, %cst_47 [2] : vector<1x8x8xf32> to vector<1x8xf32>
      %112 = vector.shape_cast %111 : vector<1x8xf32> to vector<1x8x1xf32>
      %113 = tpu.reciprocal %112 {approx = true} : vector<1x8x1xf32> -> vector<1x8x1xf32>
      %114 = vector.broadcast %113 : vector<1x8x1xf32> to vector<1x8x8xf32>
      %115 = arith.mulf %110, %114 : vector<1x8x8xf32>
      %116 = arith.truncf %115 : vector<1x8x8xf32> to vector<1x8x8xbf16>
      %cst_48 = arith.constant dense<0.000000e+00> : vector<1x8x8xf32>
      %117 = tpu.matmul %116, %104, %cst_48 {dimension_numbers = #tpu.dot_dimension_numbers<[2], [1], [1], [2], [0, 0, 0, 1, 1, 2], [0], [0]>} : vector<1x8x8xbf16>, vector<1x8x8xbf16>, vector<1x8x8xf32> -> vector<1x8x8xf32>
      %118 = arith.truncf %117 : vector<1x8x8xf32> to vector<1x8x8xbf16>
      %119 = vector.extract_strided_slice %74 {offsets = [0, 0, 16], sizes = [1, 8, 8], strides = [1, 1, 1]} : vector<1x8x96xf32> to vector<1x8x8xf32>
      %cst_49 = arith.constant 0.353553385 : f32
      %120 = vector.broadcast %cst_49 : f32 to vector<1x8x8xf32>
      %121 = arith.mulf %119, %120 : vector<1x8x8xf32>
      %122 = arith.truncf %121 : vector<1x8x8xf32> to vector<1x8x8xbf16>
      %123 = vector.extract_strided_slice %74 {offsets = [0, 0, 48], sizes = [1, 8, 8], strides = [1, 1, 1]} : vector<1x8x96xf32> to vector<1x8x8xf32>
      %124 = arith.truncf %123 : vector<1x8x8xf32> to vector<1x8x8xbf16>
      %125 = vector.extract_strided_slice %74 {offsets = [0, 0, 80], sizes = [1, 8, 8], strides = [1, 1, 1]} : vector<1x8x96xf32> to vector<1x8x8xf32>
      %126 = arith.truncf %125 : vector<1x8x8xf32> to vector<1x8x8xbf16>
      %cst_50 = arith.constant dense<0.000000e+00> : vector<1x8x8xf32>
      %127 = tpu.matmul %122, %124, %cst_50 {dimension_numbers = #tpu.dot_dimension_numbers<[2], [2], [1], [1], [0, 0, 0, 1, 1, 1], [0], [0]>} : vector<1x8x8xbf16>, vector<1x8x8xbf16>, vector<1x8x8xf32> -> vector<1x8x8xf32>
      %cst_51 = arith.constant dense<0xFF800000> : vector<1x8xf32>
      %128 = vector.multi_reduction <maximumf>, %127, %cst_51 [2] : vector<1x8x8xf32> to vector<1x8xf32>
      %129 = vector.shape_cast %128 : vector<1x8xf32> to vector<1x8x1xf32>
      %130 = vector.broadcast %129 : vector<1x8x1xf32> to vector<1x8x8xf32>
      %131 = arith.subf %127, %130 : vector<1x8x8xf32>
      %132 = math.exp %131 : vector<1x8x8xf32>
      %cst_52 = arith.constant dense<0.000000e+00> : vector<1x8xf32>
      %133 = vector.multi_reduction <add>, %132, %cst_52 [2] : vector<1x8x8xf32> to vector<1x8xf32>
      %134 = vector.shape_cast %133 : vector<1x8xf32> to vector<1x8x1xf32>
      %135 = tpu.reciprocal %134 {approx = true} : vector<1x8x1xf32> -> vector<1x8x1xf32>
      %136 = vector.broadcast %135 : vector<1x8x1xf32> to vector<1x8x8xf32>
      %137 = arith.mulf %132, %136 : vector<1x8x8xf32>
      %138 = arith.truncf %137 : vector<1x8x8xf32> to vector<1x8x8xbf16>
      %cst_53 = arith.constant dense<0.000000e+00> : vector<1x8x8xf32>
      %139 = tpu.matmul %138, %126, %cst_53 {dimension_numbers = #tpu.dot_dimension_numbers<[2], [1], [1], [2], [0, 0, 0, 1, 1, 2], [0], [0]>} : vector<1x8x8xbf16>, vector<1x8x8xbf16>, vector<1x8x8xf32> -> vector<1x8x8xf32>
      %140 = arith.truncf %139 : vector<1x8x8xf32> to vector<1x8x8xbf16>
      %141 = vector.extract_strided_slice %74 {offsets = [0, 0, 24], sizes = [1, 8, 8], strides = [1, 1, 1]} : vector<1x8x96xf32> to vector<1x8x8xf32>
      %cst_54 = arith.constant 0.353553385 : f32
      %142 = vector.broadcast %cst_54 : f32 to vector<1x8x8xf32>
      %143 = arith.mulf %141, %142 : vector<1x8x8xf32>
      %144 = arith.truncf %143 : vector<1x8x8xf32> to vector<1x8x8xbf16>
      %145 = vector.extract_strided_slice %74 {offsets = [0, 0, 56], sizes = [1, 8, 8], strides = [1, 1, 1]} : vector<1x8x96xf32> to vector<1x8x8xf32>
      %146 = arith.truncf %145 : vector<1x8x8xf32> to vector<1x8x8xbf16>
      %147 = vector.extract_strided_slice %74 {offsets = [0, 0, 88], sizes = [1, 8, 8], strides = [1, 1, 1]} : vector<1x8x96xf32> to vector<1x8x8xf32>
      %148 = arith.truncf %147 : vector<1x8x8xf32> to vector<1x8x8xbf16>
      %cst_55 = arith.constant dense<0.000000e+00> : vector<1x8x8xf32>
      %149 = tpu.matmul %144, %146, %cst_55 {dimension_numbers = #tpu.dot_dimension_numbers<[2], [2], [1], [1], [0, 0, 0, 1, 1, 1], [0], [0]>} : vector<1x8x8xbf16>, vector<1x8x8xbf16>, vector<1x8x8xf32> -> vector<1x8x8xf32>
      %cst_56 = arith.constant dense<0xFF800000> : vector<1x8xf32>
      %150 = vector.multi_reduction <maximumf>, %149, %cst_56 [2] : vector<1x8x8xf32> to vector<1x8xf32>
      %151 = vector.shape_cast %150 : vector<1x8xf32> to vector<1x8x1xf32>
      %152 = vector.broadcast %151 : vector<1x8x1xf32> to vector<1x8x8xf32>
      %153 = arith.subf %149, %152 : vector<1x8x8xf32>
      %154 = math.exp %153 : vector<1x8x8xf32>
      %cst_57 = arith.constant dense<0.000000e+00> : vector<1x8xf32>
      %155 = vector.multi_reduction <add>, %154, %cst_57 [2] : vector<1x8x8xf32> to vector<1x8xf32>
      %156 = vector.shape_cast %155 : vector<1x8xf32> to vector<1x8x1xf32>
      %157 = tpu.reciprocal %156 {approx = true} : vector<1x8x1xf32> -> vector<1x8x1xf32>
      %158 = vector.broadcast %157 : vector<1x8x1xf32> to vector<1x8x8xf32>
      %159 = arith.mulf %154, %158 : vector<1x8x8xf32>
      %160 = arith.truncf %159 : vector<1x8x8xf32> to vector<1x8x8xbf16>
      %cst_58 = arith.constant dense<0.000000e+00> : vector<1x8x8xf32>
      %161 = tpu.matmul %160, %148, %cst_58 {dimension_numbers = #tpu.dot_dimension_numbers<[2], [1], [1], [2], [0, 0, 0, 1, 1, 2], [0], [0]>} : vector<1x8x8xbf16>, vector<1x8x8xbf16>, vector<1x8x8xf32> -> vector<1x8x8xf32>
      %162 = arith.truncf %161 : vector<1x8x8xf32> to vector<1x8x8xbf16>
      %163 = tpu.concatenate %96, %118, %140, %162 in 2 : vector<1x8x8xbf16>, vector<1x8x8xbf16>, vector<1x8x8xbf16>, vector<1x8x8xbf16> -> vector<1x8x32xbf16>
      %164 = vector.shape_cast %163 : vector<1x8x32xbf16> to vector<8x32xbf16>
      %c0_59 = arith.constant 0 : index
      %c0_60 = arith.constant 0 : index
      %165 = vector.load %arg8[%c0_59, %c0_60] : memref<32x32xbf16, #tpu.memory_space<vmem>>, vector<32x32xbf16>
      %cst_61 = arith.constant dense<0.000000e+00> : vector<8x32xf32>
      %166 = tpu.matmul %164, %165, %cst_61 {dimension_numbers = #tpu.dot_dimension_numbers<[1], [0], [0], [1], [0, 0, 1, 1], [], []>} : vector<8x32xbf16>, vector<32x32xbf16>, vector<8x32xf32> -> vector<8x32xf32>
      %c0_62 = arith.constant 0 : index
      %c0_63 = arith.constant 0 : index
      %167 = vector.load %arg9[%c0_62, %c0_63] : memref<1x32xf32, #tpu.memory_space<vmem>>, vector<1x32xf32>
      %168 = vector.shape_cast %167 : vector<1x32xf32> to vector<32xf32>
      %169 = vector.shape_cast %168 : vector<32xf32> to vector<1x32xf32>
      %170 = vector.broadcast %169 : vector<1x32xf32> to vector<8x32xf32>
      %171 = arith.addf %166, %170 : vector<8x32xf32>
      %172 = arith.addf %39, %171 : vector<8x32xf32>
      %c0_64 = arith.constant 0 : index
      %c0_65 = arith.constant 0 : index
      %173 = vector.load %arg17[%c0_64, %c0_65] : memref<8x32xf32, #tpu.memory_space<vmem>>, vector<8x32xf32>
      tpu.vector_store %arg17[%c0_64, %c0_65], %172 {strides = array<i32>} : memref<8x32xf32, #tpu.memory_space<vmem>>, vector<8x32xf32>,
      %c0_66 = arith.constant 0 : index
      %c0_67 = arith.constant 0 : index
      %174 = vector.load %arg10[%c0_66, %c0_67] : memref<1x32xf32, #tpu.memory_space<vmem>>, vector<1x32xf32>
      %175 = vector.shape_cast %174 : vector<1x32xf32> to vector<32xf32>
      %c0_68 = arith.constant 0 : index
      %c0_69 = arith.constant 0 : index
      %176 = vector.load %arg11[%c0_68, %c0_69] : memref<1x32xf32, #tpu.memory_space<vmem>>, vector<1x32xf32>
      %177 = vector.shape_cast %176 : vector<1x32xf32> to vector<32xf32>
      %cst_70 = arith.constant dense<0.000000e+00> : vector<8xf32>
      %178 = vector.multi_reduction <add>, %172, %cst_70 [1] : vector<8x32xf32> to vector<8xf32>
      %179 = vector.shape_cast %178 : vector<8xf32> to vector<8x1xf32>
      %cst_71 = arith.constant 3.200000e+01 : f32
      %180 = vector.broadcast %cst_71 : f32 to vector<8x1xf32>
      %181 = arith.divf %179, %180 : vector<8x1xf32>
      %182 = vector.broadcast %181 : vector<8x1xf32> to vector<8x32xf32>
      %183 = arith.subf %172, %182 : vector<8x32xf32>
      %184 = arith.mulf %183, %183 : vector<8x32xf32>
      %cst_72 = arith.constant dense<0.000000e+00> : vector<8xf32>
      %185 = vector.multi_reduction <add>, %184, %cst_72 [1] : vector<8x32xf32> to vector<8xf32>
      %186 = vector.shape_cast %185 : vector<8xf32> to vector<8x1xf32>
      %cst_73 = arith.constant 3.200000e+01 : f32
      %187 = vector.broadcast %cst_73 : f32 to vector<8x1xf32>
      %188 = arith.divf %186, %187 : vector<8x1xf32>
      %cst_74 = arith.constant 9.99999997E-7 : f32
      %189 = vector.broadcast %cst_74 : f32 to vector<8x1xf32>
      %190 = arith.addf %188, %189 : vector<8x1xf32>
      %191 = math.rsqrt %190 : vector<8x1xf32>
      %192 = vector.broadcast %191 : vector<8x1xf32> to vector<8x32xf32>
      %193 = arith.mulf %183, %192 : vector<8x32xf32>
      %194 = vector.shape_cast %175 : vector<32xf32> to vector<1x32xf32>
      %195 = vector.broadcast %194 : vector<1x32xf32> to vector<8x32xf32>
      %196 = arith.mulf %193, %195 : vector<8x32xf32>
      %197 = vector.shape_cast %177 : vector<32xf32> to vector<1x32xf32>
      %198 = vector.broadcast %197 : vector<1x32xf32> to vector<8x32xf32>
      %199 = arith.addf %196, %198 : vector<8x32xf32>
      %200 = arith.truncf %199 : vector<8x32xf32> to vector<8x32xbf16>
      %c0_75 = arith.constant 0 : index
      %c0_76 = arith.constant 0 : index
      %201 = vector.load %arg18[%c0_75, %c0_76] : memref<8x32xbf16, #tpu.memory_space<vmem>>, vector<8x32xbf16>
      tpu.vector_store %arg18[%c0_75, %c0_76], %200 {strides = array<i32>} : memref<8x32xbf16, #tpu.memory_space<vmem>>, vector<8x32xbf16>,
    } else {
    }
    %c0 = arith.constant 0 : index
    %c0_1 = arith.constant 0 : index
    %3 = vector.load %arg18[%c0, %c0_1] : memref<8x32xbf16, #tpu.memory_space<vmem>>, vector<8x32xbf16>
    %c0_2 = arith.constant 0 : index
    %c0_3 = arith.constant 0 : index
    %4 = vector.load %arg12[%c0_2, %c0_3] : memref<32x64xbf16, #tpu.memory_space<vmem>>, vector<32x64xbf16>
    %cst = arith.constant dense<0.000000e+00> : vector<8x64xf32>
    %5 = tpu.matmul %3, %4, %cst {dimension_numbers = #tpu.dot_dimension_numbers<[1], [0], [0], [1], [0, 0, 1, 1], [], []>} : vector<8x32xbf16>, vector<32x64xbf16>, vector<8x64xf32> -> vector<8x64xf32>
    %c0_4 = arith.constant 0 : index
    %c0_5 = arith.constant 0 : index
    %6 = vector.load %arg13[%c0_4, %c0_5] : memref<1x64xf32, #tpu.memory_space<vmem>>, vector<1x64xf32>
    %7 = vector.shape_cast %6 : vector<1x64xf32> to vector<64xf32>
    %8 = vector.shape_cast %7 : vector<64xf32> to vector<1x64xf32>
    %9 = vector.broadcast %8 : vector<1x64xf32> to vector<8x64xf32>
    %10 = arith.addf %5, %9 : vector<8x64xf32>
    %cst_6 = arith.constant 5.000000e-01 : f32
    %11 = vector.broadcast %cst_6 : f32 to vector<8x64xf32>
    %12 = arith.mulf %11, %10 : vector<8x64xf32>
    %cst_7 = arith.constant 4.471500e-02 : f32
    %13 = vector.broadcast %cst_7 : f32 to vector<8x64xf32>
    %14 = arith.mulf %13, %10 : vector<8x64xf32>
    %15 = arith.mulf %14, %10 : vector<8x64xf32>
    %16 = arith.mulf %15, %10 : vector<8x64xf32>
    %17 = arith.addf %10, %16 : vector<8x64xf32>
    %cst_8 = arith.constant 0.797884583 : f32
    %18 = vector.broadcast %cst_8 : f32 to vector<8x64xf32>
    %19 = arith.mulf %18, %17 : vector<8x64xf32>
    %20 = math.tanh %19 : vector<8x64xf32>
    %cst_9 = arith.constant 1.000000e+00 : f32
    %21 = vector.broadcast %cst_9 : f32 to vector<8x64xf32>
    %22 = arith.addf %21, %20 : vector<8x64xf32>
    %23 = arith.mulf %12, %22 : vector<8x64xf32>
    %24 = arith.truncf %23 : vector<8x64xf32> to vector<8x64xbf16>
    %c0_10 = arith.constant 0 : index
    %c0_11 = arith.constant 0 : index
    %25 = vector.load %arg14[%c0_10, %c0_11] : memref<64x32xbf16, #tpu.memory_space<vmem>>, vector<64x32xbf16>
    %cst_12 = arith.constant dense<0.000000e+00> : vector<8x32xf32>
    %26 = tpu.matmul %24, %25, %cst_12 {dimension_numbers = #tpu.dot_dimension_numbers<[1], [0], [0], [1], [0, 0, 1, 1], [], []>} : vector<8x64xbf16>, vector<64x32xbf16>, vector<8x32xf32> -> vector<8x32xf32>
    %c0_i32_13 = arith.constant 0 : i32
    %27 = arith.cmpi eq, %arg1, %c0_i32_13 : i32
    %28 = arith.extui %27 : i1 to i32
    %c0_i32_14 = arith.constant 0 : i32
    %29 = arith.cmpi ne, %28, %c0_i32_14 : i32
    scf.if %29 {
      %c0_19 = arith.constant 0 : index
      %c0_20 = arith.constant 0 : index
      %36 = vector.load %arg19[%c0_19, %c0_20] : memref<8x32xf32, #tpu.memory_space<vmem>>, vector<8x32xf32>
      tpu.vector_store %arg19[%c0_19, %c0_20], %26 {strides = array<i32>} : memref<8x32xf32, #tpu.memory_space<vmem>>, vector<8x32xf32>,
    } else {
    }
    %c0_i32_15 = arith.constant 0 : i32
    %30 = arith.cmpi sgt, %arg1, %c0_i32_15 : i32
    %31 = arith.extui %30 : i1 to i32
    %c0_i32_16 = arith.constant 0 : i32
    %32 = arith.cmpi ne, %31, %c0_i32_16 : i32
    scf.if %32 {
      %c0_19 = arith.constant 0 : index
      %c0_20 = arith.constant 0 : index
      %36 = vector.load %arg19[%c0_19, %c0_20] : memref<8x32xf32, #tpu.memory_space<vmem>>, vector<8x32xf32>
      %37 = arith.addf %36, %26 : vector<8x32xf32>
      %c0_21 = arith.constant 0 : index
      %c0_22 = arith.constant 0 : index
      %38 = vector.load %arg19[%c0_21, %c0_22] : memref<8x32xf32, #tpu.memory_space<vmem>>, vector<8x32xf32>
      tpu.vector_store %arg19[%c0_21, %c0_22], %37 {strides = array<i32>} : memref<8x32xf32, #tpu.memory_space<vmem>>, vector<8x32xf32>,
    } else {
    }
    %c0_i32_17 = arith.constant 0 : i32
    %33 = arith.cmpi eq, %arg1, %c0_i32_17 : i32
    %34 = arith.extui %33 : i1 to i32
    %c0_i32_18 = arith.constant 0 : i32
    %35 = arith.cmpi ne, %34, %c0_i32_18 : i32
    scf.if %35 {
      %c0_19 = arith.constant 0 : index
      %c0_20 = arith.constant 0 : index
      %36 = vector.load %arg17[%c0_19, %c0_20] : memref<8x32xf32, #tpu.memory_space<vmem>>, vector<8x32xf32>
      %c0_21 = arith.constant 0 : index
      %c0_22 = arith.constant 0 : index
      %37 = vector.load %arg19[%c0_21, %c0_22] : memref<8x32xf32, #tpu.memory_space<vmem>>, vector<8x32xf32>
      %38 = arith.addf %36, %37 : vector<8x32xf32>
      %c0_23 = arith.constant 0 : index
      %c0_24 = arith.constant 0 : index
      %39 = vector.load %arg15[%c0_23, %c0_24] : memref<1x32xf32, #tpu.memory_space<vmem>>, vector<1x32xf32>
      %40 = vector.shape_cast %39 : vector<1x32xf32> to vector<32xf32>
      %41 = vector.shape_cast %40 : vector<32xf32> to vector<1x32xf32>
      %42 = vector.broadcast %41 : vector<1x32xf32> to vector<8x32xf32>
      %43 = arith.addf %38, %42 : vector<8x32xf32>
      %44 = vector.shape_cast %43 : vector<8x32xf32> to vector<1x8x32xf32>
      %c0_25 = arith.constant 0 : index
      %c0_26 = arith.constant 0 : index
      %c0_27 = arith.constant 0 : index
      %45 = vector.load %arg16[%c0_25, %c0_26, %c0_27] : memref<1x8x32xf32, #tpu.memory_space<vmem>>, vector<1x8x32xf32>
      tpu.vector_store %arg16[%c0_25, %c0_26, %c0_27], %44 {strides = array<i32>} : memref<1x8x32xf32, #tpu.memory_space<vmem>>, vector<1x8x32xf32>,
    } else {
    }
    return
  }
  func.func @transform_0(%arg0: i32, %arg1: i32) -> (i32, i32, i32) {
    %c0_i32 = arith.constant 0 : i32
    %c0_i32_0 = arith.constant 0 : i32
    %c0_i32_1 = arith.constant 0 : i32
    return %arg0, %c0_i32, %c0_i32_0 : i32, i32, i32
  }
  func.func @transform_1(%arg0: i32, %arg1: i32) -> (i32, i32, i32) {
    %c0_i32 = arith.constant 0 : i32
    %c0_i32_0 = arith.constant 0 : i32
    %c0_i32_1 = arith.constant 0 : i32
    %c0_i32_2 = arith.constant 0 : i32
    return %c0_i32, %c0_i32_0, %c0_i32_1 : i32, i32, i32
  }
  func.func @transform_2(%arg0: i32, %arg1: i32) -> (i32, i32) {
    %c0_i32 = arith.constant 0 : i32
    %c0_i32_0 = arith.constant 0 : i32
    %c0_i32_1 = arith.constant 0 : i32
    return %c0_i32, %c0_i32_0 : i32, i32
  }
  func.func @transform_3(%arg0: i32, %arg1: i32) -> (i32, i32) {
    %c0_i32 = arith.constant 0 : i32
    %c0_i32_0 = arith.constant 0 : i32
    %c0_i32_1 = arith.constant 0 : i32
    return %c0_i32, %c0_i32_0 : i32, i32
  }
  func.func @transform_4(%arg0: i32, %arg1: i32) -> (i32, i32) {
    %c0_i32 = arith.constant 0 : i32
    %c0_i32_0 = arith.constant 0 : i32
    %c0_i32_1 = arith.constant 0 : i32
    return %c0_i32, %c0_i32_0 : i32, i32
  }
  func.func @transform_5(%arg0: i32, %arg1: i32) -> (i32, i32) {
    %c0_i32 = arith.constant 0 : i32
    %c0_i32_0 = arith.constant 0 : i32
    %c0_i32_1 = arith.constant 0 : i32
    return %c0_i32, %c0_i32_0 : i32, i32
  }
  func.func @transform_6(%arg0: i32, %arg1: i32) -> (i32, i32) {
    %c0_i32 = arith.constant 0 : i32
    %c0_i32_0 = arith.constant 0 : i32
    %c0_i32_1 = arith.constant 0 : i32
    return %c0_i32, %c0_i32_0 : i32, i32
  }
  func.func @transform_7(%arg0: i32, %arg1: i32) -> (i32, i32) {
    %c0_i32 = arith.constant 0 : i32
    %c0_i32_0 = arith.constant 0 : i32
    %c0_i32_1 = arith.constant 0 : i32
    return %c0_i32, %c0_i32_0 : i32, i32
  }
  func.func @transform_8(%arg0: i32, %arg1: i32) -> (i32, i32) {
    %c0_i32 = arith.constant 0 : i32
    %c0_i32_0 = arith.constant 0 : i32
    %c0_i32_1 = arith.constant 0 : i32
    return %c0_i32, %c0_i32_0 : i32, i32
  }
  func.func @transform_9(%arg0: i32, %arg1: i32) -> (i32, i32) {
    %c0_i32 = arith.constant 0 : i32
    %c0_i32_0 = arith.constant 0 : i32
    %c0_i32_1 = arith.constant 0 : i32
    return %c0_i32, %c0_i32_0 : i32, i32
  }
  func.func @transform_10(%arg0: i32, %arg1: i32) -> (i32, i32) {
    %c0_i32 = arith.constant 0 : i32
    %c0_i32_0 = arith.constant 0 : i32
    return %c0_i32, %arg1 : i32, i32
  }
  func.func @transform_11(%arg0: i32, %arg1: i32) -> (i32, i32) {
    %c0_i32 = arith.constant 0 : i32
    %c0_i32_0 = arith.constant 0 : i32
    return %c0_i32, %arg1 : i32, i32
  }
  func.func @transform_12(%arg0: i32, %arg1: i32) -> (i32, i32) {
    %c0_i32 = arith.constant 0 : i32
    %c0_i32_0 = arith.constant 0 : i32
    return %arg1, %c0_i32 : i32, i32
  }
  func.func @transform_13(%arg0: i32, %arg1: i32) -> (i32, i32) {
    %c0_i32 = arith.constant 0 : i32
    %c0_i32_0 = arith.constant 0 : i32
    %c0_i32_1 = arith.constant 0 : i32
    return %c0_i32, %c0_i32_0 : i32, i32
  }
  func.func @transform_14(%arg0: i32, %arg1: i32) -> (i32, i32, i32) {
    %c0_i32 = arith.constant 0 : i32
    %c0_i32_0 = arith.constant 0 : i32
    %c0_i32_1 = arith.constant 0 : i32
    return %arg0, %c0_i32, %c0_i32_0 : i32, i32, i32
  }
}

</mosaic_0001>

<llo_original>
// kernel: tpu_custom_call.1
$region0: #{tpu_custom_call.1}
  #allocation0 [shape = 'u32[]', space=smem, size = 0x4, offset = 0x4, fixed_abs, tag = 'smem constant byte address 0x4 - core index']
  #allocation1 [shape = 'u32[72,128]{1,0:T(1,128)}', space=vmem, size = 0x9000, scoped, tag = 'internal scratch']
  #allocation2 [shape = 'f32[8,32]{1,0:T(8,128)}', space=vmem, size = 0x1000, scoped, tag = 'scratch operand']
  #allocation3 [shape = 'bf16[8,32]{1,0:T(8,128)(2,1)}', space=vmem, size = 0x800, scoped, tag = 'scratch operand']
  #allocation4 [shape = 'f32[8,32]{1,0:T(8,128)}', space=vmem, size = 0x1000, scoped, tag = 'scratch operand']
  %s0 = inlined_call_operand.vmem [shape: f32[2,8,32], index: 0, kind: input, shape index: {}]
  %s1 = inlined_call_operand.hbm [shape: f32[1,8,32], index: 1, kind: input, shape index: {}]
  %s2 = inlined_call_operand.vmem [shape: f32[1,32], index: 2, kind: input, shape index: {}]
  %s3 = inlined_call_operand.vmem [shape: f32[1,32], index: 3, kind: input, shape index: {}]
  %s4 = inlined_call_operand.vmem [shape: bf16[32,96], index: 4, kind: input, shape index: {}]
  %s5 = inlined_call_operand.vmem [shape: f32[1,96], index: 5, kind: input, shape index: {}]
  %s6 = inlined_call_operand.vmem [shape: bf16[32,32], index: 6, kind: input, shape index: {}]
  %s7 = inlined_call_operand.vmem [shape: f32[1,32], index: 7, kind: input, shape index: {}]
  %s8 = inlined_call_operand.vmem [shape: f32[1,32], index: 8, kind: input, shape index: {}]
  %s9 = inlined_call_operand.vmem [shape: f32[1,32], index: 9, kind: input, shape index: {}]
  %s10 = inlined_call_operand.hbm [shape: bf16[32,64], index: 10, kind: input, shape index: {}]
  %s11 = inlined_call_operand.vmem [shape: f32[1,64], index: 11, kind: input, shape index: {}]
  %s12 = inlined_call_operand.vmem [shape: bf16[64,32], index: 12, kind: input, shape index: {}]
  %s13 = inlined_call_operand.vmem [shape: f32[1,32], index: 13, kind: input, shape index: {}]
  %s14 = inlined_call_operand.hbm [shape: f32[2,8,32], index: 14, kind: output, shape index: {}]
  %s15 = sld [smem:[#allocation0]]
  $region113: #{tpu_custom_call.1} parent=0
    _
  %s17 = ssub.s32 1, %s15
  %s18 = scalar_select 0, %s17, %s15
  $region1: #{tpu_custom_call.1} parent=0
    #allocation5 [shape = 'u8[4096]{0}', space=vmem, size = 0x1000, scoped, tag = 'input window, operand 1, single buffered']
    #allocation6 [shape = 's32[2]{0}', space=sflag, size = 0x8, scoped, tag = 'scoped memory for tpu_custom_call.1']
    #allocation7 [shape = 's32[2]{0}', space=sflag, size = 0x8, scoped, tag = 'scoped memory for tpu_custom_call.1']
    #allocation8 [shape = 'u8[8192]{0}', space=vmem, size = 0x2000, scoped, tag = 'input window, operand 10, single buffered']
    #allocation9 [shape = 's32[1]{0}', space=sflag, size = 0x4, scoped, tag = 'scoped memory for tpu_custom_call.1']
    #allocation10 [shape = 'u8[8192]{0}', space=vmem, size = 0x2000, scoped, tag = 'output window, operand 0']
    %19 = vsyncpa [#allocation6], 0
    %20 = vsyncpa [#allocation9], 0
    %21 = vsyncpa [#allocation7], 0
    %s22 = scalar_lea.sflag [#allocation7], 1
    %23 = vsyncpa %s22, 0
    loop: start=0, step=1, limit=4
    $region2: #{tpu_custom_call.1} parent=1 // loop_pre_header
      _
    $region3: #{tpu_custom_call.1} parent=1 // loop_header
      %s25 = sphi 0, %s29
      %p26 = scmp.ge.s32.totalorder %s25, 4
      %s32 = sphi 0, %s44
      %s33 = sphi 0, %s40
      %s34 = sphi 0, %s32
      %s35 = sphi 0, %s33
      %s36 = sphi 0, %s34
      %s37 = sphi 0, %s35
      %s47 = sphi 0, %s49
      %s50 = sphi 0, %s47
      %s51 = sphi 0, %s50
      %s67 = sphi 0, %s51
      %s71 = sphi 0, %s71
      %s73 = sphi 0, %s71
      %s74 = sphi 0, %s73
      %s88 = sphi 0, %s74
      %s92 = sphi 0, %s92
      %s94 = sphi 0, %s92
      %s95 = sphi 0, %s94
      %s109 = sphi 0, %s95
      %s113 = sphi 0, %s113
      %s115 = sphi 0, %s113
      %s116 = sphi 0, %s115
      %s130 = sphi 0, %s116
      %s134 = sphi 0, %s134
      %s136 = sphi 0, %s134
      %s137 = sphi 0, %s136
      %s151 = sphi 0, %s137
      %s155 = sphi 0, %s155
      %s157 = sphi 0, %s155
      %s158 = sphi 0, %s157
      %s172 = sphi 0, %s158
      %s176 = sphi 0, %s176
      %s178 = sphi 0, %s176
      %s179 = sphi 0, %s178
      %s193 = sphi 0, %s179
      %s197 = sphi 0, %s197
      %s199 = sphi 0, %s197
      %s200 = sphi 0, %s199
      %s214 = sphi 0, %s200
      %s218 = sphi 0, %s218
      %s220 = sphi 0, %s218
      %s221 = sphi 0, %s220
      %s235 = sphi 0, %s221
      %s239 = sphi 0, %s239
      %s241 = sphi 0, %s239
      %s242 = sphi 0, %s241
      %s256 = sphi 0, %s242
      %s262 = sphi 0, %s264
      %s265 = sphi 0, %s262
      %s266 = sphi 0, %s265
      %s282 = sphi 0, %s266
      %s288 = sphi 0, %s290
      %s291 = sphi 0, %s288
      %s292 = sphi 0, %s291
      %s308 = sphi 0, %s292
      %s314 = sphi 0, %s316
      %s317 = sphi 0, %s314
      %s318 = sphi 0, %s317
      %s334 = sphi 0, %s318
      %s338 = sphi 0, %s338
      %s340 = sphi 0, %s338
      %s341 = sphi 0, %s340
      %s355 = sphi 0, %s341
      %s361 = sphi 0, %s363
      %s364 = sphi 0, %s361
      %s365 = sphi 0, %s364
      %s381 = sphi 0, %s365
    $region4: #{tpu_custom_call.1} parent=1 // loop_header_branch
      %28 = sbr.rel (%p26) target = $region8
    $region5: #{tpu_custom_call.1} parent=1 // loop_body
      %s30 = ssub.s32 %s25, 1
      %s31 = ssub.s32 %s25, 2
      %s38 = sadd.s32 1, %s33
      %p39 = scmp.ge.s32.totalorder %s38, 1
      %s40 = scalar_select %p39, 0, %s38
      %s41 = sadd.s32 1, %s32
      %s42 = scalar_select %p39, %s41, %s32
      %p43 = scmp.ge.s32.totalorder %s42, 2
      %s44 = scalar_select %p43, 0, %s42
      %s45 = ssub.s32 %s32, %s44
      %p46 = scmp.eq.s32.totalorder %s45, 0
      %s48 = sadd.s32 %s47, 1
      %s49 = scalar_select %p46, %s47, %s48
      %p52 = pneg %p46
      %p53 = scmp.eq.s32.totalorder %s25, 1
      %p54 = por %p52, %p53
      %p55 = scmp.ne.s32.totalorder %s47, %s50
      %p56 = scmp.eq.s32.totalorder %s25, 0
      %p57 = por %p55, %p56
      %p58 = scmp.ne.s32.totalorder %s47, %s50
      %p59 = scmp.eq.s32.totalorder %s30, 1
      %p60 = por %p58, %p59
      %p61 = scmp.ne.s32.totalorder %s50, %s51
      %p62 = scmp.eq.s32.totalorder %s30, 0
      %p63 = por %p61, %p62
      %p64 = scmp.ne.s32.totalorder %s50, %s51
      %p65 = scmp.eq.s32.totalorder %s31, 1
      %p66 = por %p64, %p65
      %p68 = scmp.ne.s32.totalorder %s51, %s67
      %p69 = scmp.eq.s32.totalorder %s31, 0
      %p70 = por %p68, %p69
      %s72 = sadd.s32 %s71, 1
      %p75 = scmp.eq.s32.totalorder %s25, 1
      %p76 = scmp.ne.s32.totalorder %s71, %s73
      %p77 = scmp.eq.s32.totalorder %s25, 0
      %p78 = por %p76, %p77
      %p79 = scmp.ne.s32.totalorder %s71, %s73
      %p80 = scmp.eq.s32.totalorder %s30, 1
      %p81 = por %p79, %p80
      %p82 = scmp.ne.s32.totalorder %s73, %s74
      %p83 = scmp.eq.s32.totalorder %s30, 0
      %p84 = por %p82, %p83
      %p85 = scmp.ne.s32.totalorder %s73, %s74
      %p86 = scmp.eq.s32.totalorder %s31, 1
      %p87 = por %p85, %p86
      %p89 = scmp.ne.s32.totalorder %s74, %s88
      %p90 = scmp.eq.s32.totalorder %s31, 0
      %p91 = por %p89, %p90
      %s93 = sadd.s32 %s92, 1
      %p96 = scmp.eq.s32.totalorder %s25, 1
      %p97 = scmp.ne.s32.totalorder %s92, %s94
      %p98 = scmp.eq.s32.totalorder %s25, 0
      %p99 = por %p97, %p98
      %p100 = scmp.ne.s32.totalorder %s92, %s94
      %p101 = scmp.eq.s32.totalorder %s30, 1
      %p102 = por %p100, %p101
      %p103 = scmp.ne.s32.totalorder %s94, %s95
      %p104 = scmp.eq.s32.totalorder %s30, 0
      %p105 = por %p103, %p104
      %p106 = scmp.ne.s32.totalorder %s94, %s95
      %p107 = scmp.eq.s32.totalorder %s31, 1
      %p108 = por %p106, %p107
      %p110 = scmp.ne.s32.totalorder %s95, %s109
      %p111 = scmp.eq.s32.totalorder %s31, 0
      %p112 = por %p110, %p111
      %s114 = sadd.s32 %s113, 1
      %p117 = scmp.eq.s32.totalorder %s25, 1
      %p118 = scmp.ne.s32.totalorder %s113, %s115
      %p119 = scmp.eq.s32.totalorder %s25, 0
      %p120 = por %p118, %p119
      %p121 = scmp.ne.s32.totalorder %s113, %s115
      %p122 = scmp.eq.s32.totalorder %s30, 1
      %p123 = por %p121, %p122
      %p124 = scmp.ne.s32.totalorder %s115, %s116
      %p125 = scmp.eq.s32.totalorder %s30, 0
      %p126 = por %p124, %p125
      %p127 = scmp.ne.s32.totalorder %s115, %s116
      %p128 = scmp.eq.s32.totalorder %s31, 1
      %p129 = por %p127, %p128
      %p131 = scmp.ne.s32.totalorder %s116, %s130
      %p132 = scmp.eq.s32.totalorder %s31, 0
      %p133 = por %p131, %p132
      %s135 = sadd.s32 %s134, 1
      %p138 = scmp.eq.s32.totalorder %s25, 1
      %p139 = scmp.ne.s32.totalorder %s134, %s136
      %p140 = scmp.eq.s32.totalorder %s25, 0
      %p141 = por %p139, %p140
      %p142 = scmp.ne.s32.totalorder %s134, %s136
      %p143 = scmp.eq.s32.totalorder %s30, 1
      %p144 = por %p142, %p143
      %p145 = scmp.ne.s32.totalorder %s136, %s137
      %p146 = scmp.eq.s32.totalorder %s30, 0
      %p147 = por %p145, %p146
      %p148 = scmp.ne.s32.totalorder %s136, %s137
      %p149 = scmp.eq.s32.totalorder %s31, 1
      %p150 = por %p148, %p149
      %p152 = scmp.ne.s32.totalorder %s137, %s151
      %p153 = scmp.eq.s32.totalorder %s31, 0
      %p154 = por %p152, %p153
      %s156 = sadd.s32 %s155, 1
      %p159 = scmp.eq.s32.totalorder %s25, 1
      %p160 = scmp.ne.s32.totalorder %s155, %s157
      %p161 = scmp.eq.s32.totalorder %s25, 0
      %p162 = por %p160, %p161
      %p163 = scmp.ne.s32.totalorder %s155, %s157
      %p164 = scmp.eq.s32.totalorder %s30, 1
      %p165 = por %p163, %p164
      %p166 = scmp.ne.s32.totalorder %s157, %s158
      %p167 = scmp.eq.s32.totalorder %s30, 0
      %p168 = por %p166, %p167
      %p169 = scmp.ne.s32.totalorder %s157, %s158
      %p170 = scmp.eq.s32.totalorder %s31, 1
      %p171 = por %p169, %p170
      %p173 = scmp.ne.s32.totalorder %s158, %s172
      %p174 = scmp.eq.s32.totalorder %s31, 0
      %p175 = por %p173, %p174
      %s177 = sadd.s32 %s176, 1
      %p180 = scmp.eq.s32.totalorder %s25, 1
      %p181 = scmp.ne.s32.totalorder %s176, %s178
      %p182 = scmp.eq.s32.totalorder %s25, 0
      %p183 = por %p181, %p182
      %p184 = scmp.ne.s32.totalorder %s176, %s178
      %p185 = scmp.eq.s32.totalorder %s30, 1
      %p186 = por %p184, %p185
      %p187 = scmp.ne.s32.totalorder %s178, %s179
      %p188 = scmp.eq.s32.totalorder %s30, 0
      %p189 = por %p187, %p188
      %p190 = scmp.ne.s32.totalorder %s178, %s179
      %p191 = scmp.eq.s32.totalorder %s31, 1
      %p192 = por %p190, %p191
      %p194 = scmp.ne.s32.totalorder %s179, %s193
      %p195 = scmp.eq.s32.totalorder %s31, 0
      %p196 = por %p194, %p195
      %s198 = sadd.s32 %s197, 1
      %p201 = scmp.eq.s32.totalorder %s25, 1
      %p202 = scmp.ne.s32.totalorder %s197, %s199
      %p203 = scmp.eq.s32.totalorder %s25, 0
      %p204 = por %p202, %p203
      %p205 = scmp.ne.s32.totalorder %s197, %s199
      %p206 = scmp.eq.s32.totalorder %s30, 1
      %p207 = por %p205, %p206
      %p208 = scmp.ne.s32.totalorder %s199, %s200
      %p209 = scmp.eq.s32.totalorder %s30, 0
      %p210 = por %p208, %p209
      %p211 = scmp.ne.s32.totalorder %s199, %s200
      %p212 = scmp.eq.s32.totalorder %s31, 1
      %p213 = por %p211, %p212
      %p215 = scmp.ne.s32.totalorder %s200, %s214
      %p216 = scmp.eq.s32.totalorder %s31, 0
      %p217 = por %p215, %p216
      %s219 = sadd.s32 %s218, 1
      %p222 = scmp.eq.s32.totalorder %s25, 1
      %p223 = scmp.ne.s32.totalorder %s218, %s220
      %p224 = scmp.eq.s32.totalorder %s25, 0
      %p225 = por %p223, %p224
      %p226 = scmp.ne.s32.totalorder %s218, %s220
      %p227 = scmp.eq.s32.totalorder %s30, 1
      %p228 = por %p226, %p227
      %p229 = scmp.ne.s32.totalorder %s220, %s221
      %p230 = scmp.eq.s32.totalorder %s30, 0
      %p231 = por %p229, %p230
      %p232 = scmp.ne.s32.totalorder %s220, %s221
      %p233 = scmp.eq.s32.totalorder %s31, 1
      %p234 = por %p232, %p233
      %p236 = scmp.ne.s32.totalorder %s221, %s235
      %p237 = scmp.eq.s32.totalorder %s31, 0
      %p238 = por %p236, %p237
      %s240 = sadd.s32 %s239, 1
      %p243 = scmp.eq.s32.totalorder %s25, 1
      %p244 = scmp.ne.s32.totalorder %s239, %s241
      %p245 = scmp.eq.s32.totalorder %s25, 0
      %p246 = por %p244, %p245
      %p247 = scmp.ne.s32.totalorder %s239, %s241
      %p248 = scmp.eq.s32.totalorder %s30, 1
      %p249 = por %p247, %p248
      %p250 = scmp.ne.s32.totalorder %s241, %s242
      %p251 = scmp.eq.s32.totalorder %s30, 0
      %p252 = por %p250, %p251
      %p253 = scmp.ne.s32.totalorder %s241, %s242
      %p254 = scmp.eq.s32.totalorder %s31, 1
      %p255 = por %p253, %p254
      %p257 = scmp.ne.s32.totalorder %s242, %s256
      %p258 = scmp.eq.s32.totalorder %s31, 0
      %p259 = por %p257, %p258
      %s260 = ssub.s32 %s33, %s40
      %p261 = scmp.eq.s32.totalorder %s260, 0
      %s263 = sadd.s32 %s262, 1
      %s264 = scalar_select %p261, %s262, %s263
      %p267 = pneg %p261
      %p268 = scmp.eq.s32.totalorder %s25, 1
      %p269 = por %p267, %p268
      %p270 = scmp.ne.s32.totalorder %s262, %s265
      %p271 = scmp.eq.s32.totalorder %s25, 0
      %p272 = por %p270, %p271
      %p273 = scmp.ne.s32.totalorder %s262, %s265
      %p274 = scmp.eq.s32.totalorder %s30, 1
      %p275 = por %p273, %p274
      %p276 = scmp.ne.s32.totalorder %s265, %s266
      %p277 = scmp.eq.s32.totalorder %s30, 0
      %p278 = por %p276, %p277
      %p279 = scmp.ne.s32.totalorder %s265, %s266
      %p280 = scmp.eq.s32.totalorder %s31, 1
      %p281 = por %p279, %p280
      %p283 = scmp.ne.s32.totalorder %s266, %s282
      %p284 = scmp.eq.s32.totalorder %s31, 0
      %p285 = por %p283, %p284
      %s286 = ssub.s32 %s33, %s40
      %p287 = scmp.eq.s32.totalorder %s286, 0
      %s289 = sadd.s32 %s288, 1
      %s290 = scalar_select %p287, %s288, %s289
      %p293 = pneg %p287
      %p294 = scmp.eq.s32.totalorder %s25, 1
      %p295 = por %p293, %p294
      %p296 = scmp.ne.s32.totalorder %s288, %s291
      %p297 = scmp.eq.s32.totalorder %s25, 0
      %p298 = por %p296, %p297
      %p299 = scmp.ne.s32.totalorder %s288, %s291
      %p300 = scmp.eq.s32.totalorder %s30, 1
      %p301 = por %p299, %p300
      %p302 = scmp.ne.s32.totalorder %s291, %s292
      %p303 = scmp.eq.s32.totalorder %s30, 0
      %p304 = por %p302, %p303
      %p305 = scmp.ne.s32.totalorder %s291, %s292
      %p306 = scmp.eq.s32.totalorder %s31, 1
      %p307 = por %p305, %p306
      %p309 = scmp.ne.s32.totalorder %s292, %s308
      %p310 = scmp.eq.s32.totalorder %s31, 0
      %p311 = por %p309, %p310
      %s312 = ssub.s32 %s33, %s40
      %p313 = scmp.eq.s32.totalorder %s312, 0
      %s315 = sadd.s32 %s314, 1
      %s316 = scalar_select %p313, %s314, %s315
      %p319 = pneg %p313
      %p320 = scmp.eq.s32.totalorder %s25, 1
      %p321 = por %p319, %p320
      %p322 = scmp.ne.s32.totalorder %s314, %s317
      %p323 = scmp.eq.s32.totalorder %s25, 0
      %p324 = por %p322, %p323
      %p325 = scmp.ne.s32.totalorder %s314, %s317
      %p326 = scmp.eq.s32.totalorder %s30, 1
      %p327 = por %p325, %p326
      %p328 = scmp.ne.s32.totalorder %s317, %s318
      %p329 = scmp.eq.s32.totalorder %s30, 0
      %p330 = por %p328, %p329
      %p331 = scmp.ne.s32.totalorder %s317, %s318
      %p332 = scmp.eq.s32.totalorder %s31, 1
      %p333 = por %p331, %p332
      %p335 = scmp.ne.s32.totalorder %s318, %s334
      %p336 = scmp.eq.s32.totalorder %s31, 0
      %p337 = por %p335, %p336
      %s339 = sadd.s32 %s338, 1
      %p342 = scmp.eq.s32.totalorder %s25, 1
      %p343 = scmp.ne.s32.totalorder %s338, %s340
      %p344 = scmp.eq.s32.totalorder %s25, 0
      %p345 = por %p343, %p344
      %p346 = scmp.ne.s32.totalorder %s338, %s340
      %p347 = scmp.eq.s32.totalorder %s30, 1
      %p348 = por %p346, %p347
      %p349 = scmp.ne.s32.totalorder %s340, %s341
      %p350 = scmp.eq.s32.totalorder %s30, 0
      %p351 = por %p349, %p350
      %p352 = scmp.ne.s32.totalorder %s340, %s341
      %p353 = scmp.eq.s32.totalorder %s31, 1
      %p354 = por %p352, %p353
      %p356 = scmp.ne.s32.totalorder %s341, %s355
      %p357 = scmp.eq.s32.totalorder %s31, 0
      %p358 = por %p356, %p357
      %s359 = ssub.s32 %s32, %s44
      %p360 = scmp.eq.s32.totalorder %s359, 0
      %s362 = sadd.s32 %s361, 1
      %s363 = scalar_select %p360, %s361, %s362
      %p366 = pneg %p360
      %p367 = scmp.eq.s32.totalorder %s25, 1
      %p368 = por %p366, %p367
      %p369 = scmp.ne.s32.totalorder %s361, %s364
      %p370 = scmp.eq.s32.totalorder %s25, 0
      %p371 = por %p369, %p370
      %p372 = scmp.ne.s32.totalorder %s361, %s364
      %p373 = scmp.eq.s32.totalorder %s30, 1
      %p374 = por %p372, %p373
      %p375 = scmp.ne.s32.totalorder %s364, %s365
      %p376 = scmp.eq.s32.totalorder %s30, 0
      %p377 = por %p375, %p376
      %p378 = scmp.ne.s32.totalorder %s364, %s365
      %p379 = scmp.eq.s32.totalorder %s31, 1
      %p380 = por %p378, %p379
      %p382 = scmp.ne.s32.totalorder %s365, %s381
      %p383 = scmp.eq.s32.totalorder %s31, 0
      %p384 = por %p382, %p383
      %p385 = scmp.le.s32.totalorder 1, %s25
      %p386 = scmp.lt.s32.totalorder %s25, 3
      %p387 = pnand %p385, %p386
      %p388 = pneg %p387
      // Predicated region
      $region9: #{tpu_custom_call.1} parent=5 // pred_check
        _
      $region10: #{tpu_custom_call.1} parent=5 // pred_check_branch
        %390 = sbr.rel (%p387) target = $region12
      $region11: #{tpu_custom_call.1} parent=5 // pred_region
        %s391 = ssub.s32 %s25, 1
        // Predicated region
        $region13: #{tpu_custom_call.1} parent=11 // pred_check
          %p392 = pneg %p84
        $region14: #{tpu_custom_call.1} parent=11 // pred_check_branch
          %394 = sbr.rel (%p392) target = $region16
        $region15: #{tpu_custom_call.1} parent=11 // pred_region
          %396 = vsyncadd [#allocation6], 0
          %s398 = sshll.u32 %s1, 4
          %s399 = int_to_ptr.hbm [resolvable:$true] %s398
          %s400 = sshll.u32 [#allocation5], 4
          %s401 = int_to_ptr.vmem [resolvable:$true] %s400
          %403 = dma.hbm_to_vmem [thread:$0]  %s399, 128, %s401, [#allocation6]
        $region16: #{tpu_custom_call.1} parent=11 // pred_fallthru
          _
        // Predicated region
        $region17: #{tpu_custom_call.1} parent=11 // pred_check
          %p404 = pneg %p105
        $region18: #{tpu_custom_call.1} parent=11 // pred_check_branch
          %406 = sbr.rel (%p404) target = $region20
        $region19: #{tpu_custom_call.1} parent=11 // pred_region
          _
        $region20: #{tpu_custom_call.1} parent=11 // pred_fallthru
          _
        // Predicated region
        $region21: #{tpu_custom_call.1} parent=11 // pred_check
          %p407 = pneg %p126
        $region22: #{tpu_custom_call.1} parent=11 // pred_check_branch
          %409 = sbr.rel (%p407) target = $region24
        $region23: #{tpu_custom_call.1} parent=11 // pred_region
          _
        $region24: #{tpu_custom_call.1} parent=11 // pred_fallthru
          _
        // Predicated region
        $region25: #{tpu_custom_call.1} parent=11 // pred_check
          %p410 = pneg %p147
        $region26: #{tpu_custom_call.1} parent=11 // pred_check_branch
          %412 = sbr.rel (%p410) target = $region28
        $region27: #{tpu_custom_call.1} parent=11 // pred_region
          _
        $region28: #{tpu_custom_call.1} parent=11 // pred_fallthru
          _
        // Predicated region
        $region29: #{tpu_custom_call.1} parent=11 // pred_check
          %p413 = pneg %p168
        $region30: #{tpu_custom_call.1} parent=11 // pred_check_branch
          %415 = sbr.rel (%p413) target = $region32
        $region31: #{tpu_custom_call.1} parent=11 // pred_region
          _
        $region32: #{tpu_custom_call.1} parent=11 // pred_fallthru
          _
        // Predicated region
        $region33: #{tpu_custom_call.1} parent=11 // pred_check
          %p416 = pneg %p189
        $region34: #{tpu_custom_call.1} parent=11 // pred_check_branch
          %418 = sbr.rel (%p416) target = $region36
        $region35: #{tpu_custom_call.1} parent=11 // pred_region
          _
        $region36: #{tpu_custom_call.1} parent=11 // pred_fallthru
          _
        // Predicated region
        $region37: #{tpu_custom_call.1} parent=11 // pred_check
          %p419 = pneg %p210
        $region38: #{tpu_custom_call.1} parent=11 // pred_check_branch
          %421 = sbr.rel (%p419) target = $region40
        $region39: #{tpu_custom_call.1} parent=11 // pred_region
          _
        $region40: #{tpu_custom_call.1} parent=11 // pred_fallthru
          _
        // Predicated region
        $region41: #{tpu_custom_call.1} parent=11 // pred_check
          %p422 = pneg %p231
        $region42: #{tpu_custom_call.1} parent=11 // pred_check_branch
          %424 = sbr.rel (%p422) target = $region44
        $region43: #{tpu_custom_call.1} parent=11 // pred_region
          _
        $region44: #{tpu_custom_call.1} parent=11 // pred_fallthru
          _
        // Predicated region
        $region45: #{tpu_custom_call.1} parent=11 // pred_check
          %p425 = pneg %p252
        $region46: #{tpu_custom_call.1} parent=11 // pred_check_branch
          %427 = sbr.rel (%p425) target = $region48
        $region47: #{tpu_custom_call.1} parent=11 // pred_region
          _
        $region48: #{tpu_custom_call.1} parent=11 // pred_fallthru
          _
        // Predicated region
        $region49: #{tpu_custom_call.1} parent=11 // pred_check
          %p428 = pneg %p278
        $region50: #{tpu_custom_call.1} parent=11 // pred_check_branch
          %430 = sbr.rel (%p428) target = $region52
        $region51: #{tpu_custom_call.1} parent=11 // pred_region
          %432 = vsyncadd [#allocation9], 0
          %s433 = smul.addr %s35, 4
          %s434 = scalar_lea.hbm %s10, %s433
          %s435 = sshll.u32 %s434, 4
          %s436 = int_to_ptr.hbm [resolvable:$true] %s435
          %s437 = sshll.u32 [#allocation8], 4
          %s438 = int_to_ptr.vmem [resolvable:$true] %s437
          %443 = dma.hbm_to_vmem [thread:$0]  %s436, 256, %s438, [#allocation9], 64, 64, 4
        $region52: #{tpu_custom_call.1} parent=11 // pred_fallthru
          _
        // Predicated region
        $region53: #{tpu_custom_call.1} parent=11 // pred_check
          %p444 = pneg %p304
        $region54: #{tpu_custom_call.1} parent=11 // pred_check_branch
          %446 = sbr.rel (%p444) target = $region56
        $region55: #{tpu_custom_call.1} parent=11 // pred_region
          %p447 = scmp.lt.s32.totalorder %s35, 0
          %s448 = scalar_select %p447, %s35, 0
          %s449 = scalar_lea.vmem %s11, %s448
        $region56: #{tpu_custom_call.1} parent=11 // pred_fallthru
          _
        // Predicated region
        $region57: #{tpu_custom_call.1} parent=11 // pred_check
          %p450 = pneg %p330
        $region58: #{tpu_custom_call.1} parent=11 // pred_check_branch
          %452 = sbr.rel (%p450) target = $region60
        $region59: #{tpu_custom_call.1} parent=11 // pred_region
          %s453 = smul.u32 8, %s35
          %p454 = scmp.lt.s32.totalorder %s453, 7
          %s455 = scalar_select %p454, %s453, 7
          %s456 = smul.addr %s455, 4
          %s457 = scalar_lea.vmem %s12, %s456
          %s458 = smul.u32 8, %s35
        $region60: #{tpu_custom_call.1} parent=11 // pred_fallthru
          _
        // Predicated region
        $region61: #{tpu_custom_call.1} parent=11 // pred_check
          %p459 = pneg %p351
        $region62: #{tpu_custom_call.1} parent=11 // pred_check_branch
          %461 = sbr.rel (%p459) target = $region64
        $region63: #{tpu_custom_call.1} parent=11 // pred_region
          _
        $region64: #{tpu_custom_call.1} parent=11 // pred_fallthru
          _
      $region12: #{tpu_custom_call.1} parent=5 // pred_fallthru
        _
      %p462 = scmp.lt.s32.totalorder %s25, 2
      // Predicated region
      $region65: #{tpu_custom_call.1} parent=5 // pred_check
        %p463 = pneg %p462
      $region66: #{tpu_custom_call.1} parent=5 // pred_check_branch
        %465 = sbr.rel (%p463) target = $region68
      $region67: #{tpu_custom_call.1} parent=5 // pred_region
        // Predicated region
        $region69: #{tpu_custom_call.1} parent=67 // pred_check
          %p466 = pneg %p57
        $region70: #{tpu_custom_call.1} parent=67 // pred_check_branch
          %468 = sbr.rel (%p466) target = $region72
        $region71: #{tpu_custom_call.1} parent=67 // pred_region
          %p469 = scmp.lt.s32.totalorder %s32, 1
          %s470 = scalar_select %p469, %s32, 1
          %s471 = smul.addr %s470, 8
          %s472 = scalar_lea.vmem %s0, %s471
        $region72: #{tpu_custom_call.1} parent=67 // pred_fallthru
          _
      $region68: #{tpu_custom_call.1} parent=5 // pred_fallthru
        _
      %p473 = scmp.le.s32.totalorder 1, %s25
      %p474 = scmp.lt.s32.totalorder %s25, 3
      %p475 = pnand %p473, %p474
      %p476 = pneg %p475
      // Predicated region
      $region73: #{tpu_custom_call.1} parent=5 // pred_check
        _
      $region74: #{tpu_custom_call.1} parent=5 // pred_check_branch
        %478 = sbr.rel (%p475) target = $region76
      $region75: #{tpu_custom_call.1} parent=5 // pred_region
        %s479 = ssub.s32 %s25, 1
        // Predicated region
        $region77: #{tpu_custom_call.1} parent=75 // pred_check
          %p480 = pneg %p84
        $region78: #{tpu_custom_call.1} parent=75 // pred_check_branch
          %482 = sbr.rel (%p480) target = $region80
        $region79: #{tpu_custom_call.1} parent=75 // pred_region
          %484 = dma.done [#allocation6], 128
        $region80: #{tpu_custom_call.1} parent=75 // pred_fallthru
          _
        // Predicated region
        $region81: #{tpu_custom_call.1} parent=75 // pred_check
          %p485 = pneg %p278
        $region82: #{tpu_custom_call.1} parent=75 // pred_check_branch
          %487 = sbr.rel (%p485) target = $region84
        $region83: #{tpu_custom_call.1} parent=75 // pred_region
          %489 = dma.done [#allocation9], 256
        $region84: #{tpu_custom_call.1} parent=75 // pred_fallthru
          _
        %p490 = scmp.lt.s32.totalorder %s34, 1
        %s491 = scalar_select %p490, %s34, 1
        %s492 = smul.addr %s491, 8
        %s493 = scalar_lea.vmem %s0, %s492
        %p494 = pneg %p63
        %p495 = pneg %p60
        %p496 = pneg %p84
        %p497 = pneg %p81
        %p498 = pneg %p105
        %p499 = pneg %p102
        %p500 = pneg %p126
        %p501 = pneg %p123
        %p502 = pneg %p147
        %p503 = pneg %p144
        %p504 = pneg %p168
        %p505 = pneg %p165
        %p506 = pneg %p189
        %p507 = pneg %p186
        %p508 = pneg %p210
        %p509 = pneg %p207
        %p510 = pneg %p231
        %p511 = pneg %p228
        %p512 = pneg %p252
        %p513 = pneg %p249
        %p514 = pneg %p278
        %p515 = pneg %p275
        %p516 = scmp.lt.s32.totalorder %s35, 0
        %s517 = scalar_select %p516, %s35, 0
        %s518 = scalar_lea.vmem %s11, %s517
        %p519 = pneg %p304
        %p520 = pneg %p301
        %s521 = smul.u32 8, %s35
        %p522 = scmp.lt.s32.totalorder %s521, 7
        %s523 = scalar_select %p522, %s521, 7
        %s524 = smul.addr %s523, 4
        %s525 = scalar_lea.vmem %s12, %s524
        %p526 = pneg %p330
        %p527 = pneg %p327
        %p528 = pneg %p351
        %p529 = pneg %p348
        %p530 = pneg %p377
        %p531 = pneg %p374
        %s532 = sand.u32 %s364, 1
        %s533 = scalar_lea.sflag [#allocation7], %s532
        %s534 = sand.u32 %s364, 1
        %s535 = smul.addr %s534, 8
        %s536 = scalar_lea.vmem [#allocation10], %s535
        %p537 = scmp.lt.s32.totalorder %s34, 1
        %s538 = scalar_select %p537, %s34, 1
        %s539 = smul.addr %s538, 8
        %s540 = scalar_lea.vmem %s0, %s539
        %p541 = scmp.lt.s32.totalorder %s35, 0
        %s542 = scalar_select %p541, %s35, 0
        %s543 = scalar_lea.vmem %s11, %s542
        %s544 = smul.u32 8, %s35
        %p545 = scmp.lt.s32.totalorder %s544, 7
        %s546 = scalar_select %p545, %s544, 7
        %s547 = smul.addr %s546, 4
        %s548 = scalar_lea.vmem %s12, %s547
        %s549 = smul.u32 8, %s35
        %p551 = scmp.eq.s32.totalorder %s35, 0
        // Predicated region
        $region85: #{tpu_custom_call.1} parent=75 // pred_check
          %p552 = pneg %p551
        $region86: #{tpu_custom_call.1} parent=75 // pred_check_branch
          %554 = sbr.rel (%p552) target = $region88
        $region87: #{tpu_custom_call.1} parent=75 // pred_region
          %v555 = vld [vmem:[%s540] sm:$0xff]
          %v556 = vld [vmem:[#allocation5] sm:$0xff]
          %v557 = vadd.f32 %v555, %v556
          %v558 = vld [vmem:[%s2] sm:$0x1]
          %v559 = vld [vmem:[%s3] sm:$0x1]
          %vm560 = vcmask 261120
          %v561 = vsel %vm560, %v557, 0.0
          %562 = vadd.xlane.f32.xlu0 %v561
          %v563 = vpop.xlane.xlu0 %562
          %v564 = vrcp.pop 32.0
          %v565 = vmul.f32 32.0, %v564
          %v566 = vsub.f32 1.0, %v565
          %v567 = vmul.f32 %v564, %v566
          %v568 = vadd.f32 %v564, %v567
          %vm569 = vweird.f32 %v564
          %v570 = vsel %vm569, %v564, %v568
          %v571 = vmul.f32 %v563, %v570
          %v572 = vsub.f32 %v557, %v571
          %v573 = vmul.f32 %v572, %v572
          %v574 = vsel %vm560, %v573, 0.0
          %575 = vadd.xlane.f32.xlu0 %v574
          %v576 = vpop.xlane.xlu0 %575
          %v577 = vmul.f32 %v576, %v570
          %v578 = vadd.f32 %v577, 1e-06
          %v579 = vrsqrt.pop %v578
          %v580 = vmul.f32 %v579, %v578
          %v581 = vmul.f32 %v580, %v579
          %v582 = vmul.f32 0.5, %v581
          %v583 = vsub.f32 1.5, %v582
          %v584 = vmul.f32 %v579, %v583
          %vm585 = vweird.f32 %v578
          %vm586 = vweird.f32 %v579
          %vm587 = vmor %vm585, %vm586
          %v588 = vsel %vm587, %v579, %v584
          %v589 = vmul.f32 %v572, %v588
          %v591 = vperm.slane %v558, 0
          %v593 = vmul.f32 %v589, %v591
          %v595 = vperm.slane %v559, 0
          %v597 = vadd.f32 %v593, %v595
          %v598 = vpack.c.bf16 %v597, %v597
          %v599 = vld [vmem:[%s4] sm:$0xf]
          %v600 = vld [vmem:[%s4 + $0x4] sm:$0xf]
          %v601 = vld [vmem:[%s4 + $0x8] sm:$0xf]
          %v602 = vld [vmem:[%s4 + $0xc] sm:$0xf]
          %v603 = vld [vmem:[%s5] sm:$0x1]
          %v605 = vperm.slane %v603, 0
          %v611 = vunpack.c.l.b16 %v599
          %v612 = vunpack.c.l.b16 %v600
          %v613 = vunpack.c.l.b16 %v601
          %v614 = vunpack.c.l.b16 %v602
          %v615 = vpack.c.b16 %v612, %v611
          %v616 = vpack.c.b16 %v614, %v613
          %v620 = vsel %vm560, %v598, 0
          %622 = vmatpush.bf16.msra.mxu0 0
          %623 = vmatpush.bf16.msra.mxu0 0
          %624 = vmatpush.bf16.msra.mxu0 0
          %625 = vmatpush.bf16.msra.mxu0 0
          %626 = vmatpush.bf16.msra.mxu0 0
          %627 = vmatpush.bf16.msra.mxu0 0
          %628 = vmatpush.bf16.msra.mxu0 %v616
          %629 = vmatpush.bf16.msra.mxu0 %v615
          %630 = vmatmul.bf16.gmra.mxu0 %v620
          %v631 = vpop.f32.mrf.mxu0
          %v632 = vadd.f32 %v605, %v631
          %v633 = vpop.f32.mrf.mxu0
          %634 = vdwg.mxu0
          %v635 = vmul.f32 %v632, 0.35355338
          %v636 = vpack.c.bf16 %v635, %v635
          %v637 = vpack.c.bf16 %v632, %v632
          %v639 = vunpack.c.l.b16 %v637
          %v640 = vpack.c.b16 %v639, %v639
          %641 = vrot.lane.b32.xlu0 %v640, 96
          %v642 = vpop.permute.xlu0 %641
          %vm643 = vcmask 64512
          %v645 = vsel %vm643, %v636, 0
          %v648 = vsel %vm643, %v642, 0
          %650 = vmatpush.bf16.xpose.msra.mxu0 0
          %651 = vmatpush.bf16.xpose.msra.mxu0 0
          %652 = vmatpush.bf16.xpose.msra.mxu0 0
          %653 = vmatpush.bf16.xpose.msra.mxu0 0
          %654 = vmatpush.bf16.xpose.msra.mxu0 0
          %655 = vmatpush.bf16.xpose.msra.mxu0 0
          %656 = vmatpush.bf16.xpose.msra.mxu0 0
          %657 = vmatpush.bf16.xpose.msra.mxu0 %v648
          %658 = vmatmul.bf16.gmra.mxu0 %v645
          %v659 = vpop.f32.mrf.mxu0
          %v660 = vadd.f32 0.0, %v659
          %v661 = vpop.f32.mrf.mxu0
          %662 = vdwg.mxu0
          %v663 = vsel %vm643, %v660, -inf
          %664 = vmax.xlane.f32.xlu0 %v663
          %v665 = vpop.xlane.xlu0 %664
          %v666 = vsub.f32 %v660, %v665
          %v667 = vmul.f32 %v666, 1.442695
          %v668 = vpow.pop %v667
          %v669 = vsel %vm643, %v668, 0.0
          %670 = vadd.xlane.f32.xlu0 %v669
          %v671 = vpop.xlane.xlu0 %670
          %v672 = vrcp.pop %v671
          %v673 = vmul.f32 %v668, %v672
          %v674 = vpack.c.bf16 %v673, %v673
          %675 = vrot.lane.b32.xlu0 %v640, 64
          %v676 = vpop.permute.xlu0 %675
          %v678 = vsel %vm643, %v674, 0
          %vm680 = vcmask 1043456
          %v682 = vsel %vm680, %v676, 0
          %684 = vmatpush.bf16.msra.mxu0 0
          %685 = vmatpush.bf16.msra.mxu0 0
          %686 = vmatpush.bf16.msra.mxu0 0
          %687 = vmatpush.bf16.msra.mxu0 0
          %688 = vmatpush.bf16.msra.mxu0 0
          %689 = vmatpush.bf16.msra.mxu0 0
          %690 = vmatpush.bf16.msra.mxu0 0
          %691 = vmatpush.bf16.msra.mxu0 %v682
          %692 = vmatmul.bf16.gmra.mxu0 %v678
          %v693 = vpop.f32.mrf.mxu0
          %v694 = vadd.f32 0.0, %v693
          %v695 = vpop.f32.mrf.mxu0
          %696 = vdwg.mxu0
          %v697 = vpack.c.bf16 %v694, %v694
          %v699 = vunpack.c.l.b16 %v636
          %v700 = vpack.c.b16 %v699, %v699
          %701 = vrot.lane.b32.xlu0 %v700, 120
          %v702 = vpop.permute.xlu0 %701
          %703 = vrot.lane.b32.xlu0 %v640, 88
          %v704 = vpop.permute.xlu0 %703
          %v706 = vsel %vm643, %v702, 0
          %v709 = vsel %vm643, %v704, 0
          %711 = vmatpush.bf16.xpose.msra.mxu0 0
          %712 = vmatpush.bf16.xpose.msra.mxu0 0
          %713 = vmatpush.bf16.xpose.msra.mxu0 0
          %714 = vmatpush.bf16.xpose.msra.mxu0 0
          %715 = vmatpush.bf16.xpose.msra.mxu0 0
          %716 = vmatpush.bf16.xpose.msra.mxu0 0
          %717 = vmatpush.bf16.xpose.msra.mxu0 0
          %718 = vmatpush.bf16.xpose.msra.mxu0 %v709
          %719 = vmatmul.bf16.gmra.mxu0 %v706
          %v720 = vpop.f32.mrf.mxu0
          %v721 = vadd.f32 0.0, %v720
          %v722 = vpop.f32.mrf.mxu0
          %723 = vdwg.mxu0
          %v724 = vsel %vm643, %v721, -inf
          %725 = vmax.xlane.f32.xlu0 %v724
          %v726 = vpop.xlane.xlu0 %725
          %v727 = vsub.f32 %v721, %v726
          %v728 = vmul.f32 %v727, 1.442695
          %v729 = vpow.pop %v728
          %v730 = vsel %vm643, %v729, 0.0
          %731 = vadd.xlane.f32.xlu0 %v730
          %v732 = vpop.xlane.xlu0 %731
          %v733 = vrcp.pop %v732
          %v734 = vmul.f32 %v729, %v733
          %v735 = vpack.c.bf16 %v734, %v734
          %736 = vrot.lane.b32.xlu0 %v640, 56
          %v737 = vpop.permute.xlu0 %736
          %v739 = vsel %vm643, %v735, 0
          %v742 = vsel %vm680, %v737, 0
          %744 = vmatpush.bf16.msra.mxu0 0
          %745 = vmatpush.bf16.msra.mxu0 0
          %746 = vmatpush.bf16.msra.mxu0 0
          %747 = vmatpush.bf16.msra.mxu0 0
          %748 = vmatpush.bf16.msra.mxu0 0
          %749 = vmatpush.bf16.msra.mxu0 0
          %750 = vmatpush.bf16.msra.mxu0 0
          %751 = vmatpush.bf16.msra.mxu0 %v742
          %752 = vmatmul.bf16.gmra.mxu0 %v739
          %v753 = vpop.f32.mrf.mxu0
          %v754 = vadd.f32 0.0, %v753
          %v755 = vpop.f32.mrf.mxu0
          %756 = vdwg.mxu0
          %v757 = vpack.c.bf16 %v754, %v754
          %758 = vrot.lane.b32.xlu0 %v700, 112
          %v759 = vpop.permute.xlu0 %758
          %760 = vrot.lane.b32.xlu0 %v640, 80
          %v761 = vpop.permute.xlu0 %760
          %v763 = vsel %vm643, %v759, 0
          %v766 = vsel %vm643, %v761, 0
          %768 = vmatpush.bf16.xpose.msra.mxu0 0
          %769 = vmatpush.bf16.xpose.msra.mxu0 0
          %770 = vmatpush.bf16.xpose.msra.mxu0 0
          %771 = vmatpush.bf16.xpose.msra.mxu0 0
          %772 = vmatpush.bf16.xpose.msra.mxu0 0
          %773 = vmatpush.bf16.xpose.msra.mxu0 0
          %774 = vmatpush.bf16.xpose.msra.mxu0 0
          %775 = vmatpush.bf16.xpose.msra.mxu0 %v766
          %776 = vmatmul.bf16.gmra.mxu0 %v763
          %v777 = vpop.f32.mrf.mxu0
          %v778 = vadd.f32 0.0, %v777
          %v779 = vpop.f32.mrf.mxu0
          %780 = vdwg.mxu0
          %v781 = vsel %vm643, %v778, -inf
          %782 = vmax.xlane.f32.xlu0 %v781
          %v783 = vpop.xlane.xlu0 %782
          %v784 = vsub.f32 %v778, %v783
          %v785 = vmul.f32 %v784, 1.442695
          %v786 = vpow.pop %v785
          %v787 = vsel %vm643, %v786, 0.0
          %788 = vadd.xlane.f32.xlu0 %v787
          %v789 = vpop.xlane.xlu0 %788
          %v790 = vrcp.pop %v789
          %v791 = vmul.f32 %v786, %v790
          %v792 = vpack.c.bf16 %v791, %v791
          %793 = vrot.lane.b32.xlu0 %v640, 48
          %v794 = vpop.permute.xlu0 %793
          %v796 = vsel %vm643, %v792, 0
          %v799 = vsel %vm680, %v794, 0
          %801 = vmatpush.bf16.msra.mxu0 0
          %802 = vmatpush.bf16.msra.mxu0 0
          %803 = vmatpush.bf16.msra.mxu0 0
          %804 = vmatpush.bf16.msra.mxu0 0
          %805 = vmatpush.bf16.msra.mxu0 0
          %806 = vmatpush.bf16.msra.mxu0 0
          %807 = vmatpush.bf16.msra.mxu0 0
          %808 = vmatpush.bf16.msra.mxu0 %v799
          %809 = vmatmul.bf16.gmra.mxu0 %v796
          %v810 = vpop.f32.mrf.mxu0
          %v811 = vadd.f32 0.0, %v810
          %v812 = vpop.f32.mrf.mxu0
          %813 = vdwg.mxu0
          %v814 = vpack.c.bf16 %v811, %v811
          %815 = vrot.lane.b32.xlu0 %v700, 104
          %v816 = vpop.permute.xlu0 %815
          %817 = vrot.lane.b32.xlu0 %v640, 72
          %v818 = vpop.permute.xlu0 %817
          %v820 = vsel %vm643, %v816, 0
          %v823 = vsel %vm643, %v818, 0
          %825 = vmatpush.bf16.xpose.msra.mxu0 0
          %826 = vmatpush.bf16.xpose.msra.mxu0 0
          %827 = vmatpush.bf16.xpose.msra.mxu0 0
          %828 = vmatpush.bf16.xpose.msra.mxu0 0
          %829 = vmatpush.bf16.xpose.msra.mxu0 0
          %830 = vmatpush.bf16.xpose.msra.mxu0 0
          %831 = vmatpush.bf16.xpose.msra.mxu0 0
          %832 = vmatpush.bf16.xpose.msra.mxu0 %v823
          %833 = vmatmul.bf16.gmra.mxu0 %v820
          %v834 = vpop.f32.mrf.mxu0
          %v835 = vadd.f32 0.0, %v834
          %v836 = vpop.f32.mrf.mxu0
          %837 = vdwg.mxu0
          %v838 = vsel %vm643, %v835, -inf
          %839 = vmax.xlane.f32.xlu0 %v838
          %v840 = vpop.xlane.xlu0 %839
          %v841 = vsub.f32 %v835, %v840
          %v842 = vmul.f32 %v841, 1.442695
          %v843 = vpow.pop %v842
          %v844 = vsel %vm643, %v843, 0.0
          %845 = vadd.xlane.f32.xlu0 %v844
          %v846 = vpop.xlane.xlu0 %845
          %v847 = vrcp.pop %v846
          %v848 = vmul.f32 %v843, %v847
          %v849 = vpack.c.bf16 %v848, %v848
          %850 = vrot.lane.b32.xlu0 %v640, 40
          %v851 = vpop.permute.xlu0 %850
          %v853 = vsel %vm643, %v849, 0
          %v856 = vsel %vm680, %v851, 0
          %858 = vmatpush.bf16.msra.mxu0 0
          %859 = vmatpush.bf16.msra.mxu0 0
          %860 = vmatpush.bf16.msra.mxu0 0
          %861 = vmatpush.bf16.msra.mxu0 0
          %862 = vmatpush.bf16.msra.mxu0 0
          %863 = vmatpush.bf16.msra.mxu0 0
          %864 = vmatpush.bf16.msra.mxu0 0
          %865 = vmatpush.bf16.msra.mxu0 %v856
          %866 = vmatmul.bf16.gmra.mxu0 %v853
          %v867 = vpop.f32.mrf.mxu0
          %v868 = vadd.f32 0.0, %v867
          %v869 = vpop.f32.mrf.mxu0
          %870 = vdwg.mxu0
          %v871 = vpack.c.bf16 %v868, %v868
          %v873 = vunpack.c.l.b16 %v757
          %v874 = vpack.c.b16 %v873, %v873
          %875 = vrot.lane.b32.xlu0 %v874, 8
          %v876 = vpop.permute.xlu0 %875
          %v878 = vunpack.c.l.b16 %v814
          %v879 = vpack.c.b16 %v878, %v878
          %880 = vrot.lane.b32.xlu0 %v879, 16
          %v881 = vpop.permute.xlu0 %880
          %v883 = vunpack.c.l.b16 %v871
          %v884 = vpack.c.b16 %v883, %v883
          %885 = vrot.lane.b32.xlu0 %v884, 24
          %v886 = vpop.permute.xlu0 %885
          %v889 = vsel %vm643, %v697, %v876
          %vm890 = vcmask 130048
          %v892 = vsel %vm890, %v889, %v881
          %vm893 = vcmask 195584
          %v895 = vsel %vm893, %v892, %v886
          %v896 = vld [vmem:[%s6] sm:$0xf]
          %v897 = vld [vmem:[%s6 + $0x4] sm:$0xf]
          %v898 = vld [vmem:[%s6 + $0x8] sm:$0xf]
          %v899 = vld [vmem:[%s6 + $0xc] sm:$0xf]
          %v900 = vld [vmem:[%s7] sm:$0x1]
          %v902 = vperm.slane %v900, 0
          %v908 = vunpack.c.l.b16 %v896
          %v909 = vunpack.c.l.b16 %v897
          %v910 = vunpack.c.l.b16 %v898
          %v911 = vunpack.c.l.b16 %v899
          %v912 = vpack.c.b16 %v909, %v908
          %v913 = vpack.c.b16 %v911, %v910
          %v916 = vsel %vm560, %v895, 0
          %918 = vmatpush.bf16.msra.mxu0 0
          %919 = vmatpush.bf16.msra.mxu0 0
          %920 = vmatpush.bf16.msra.mxu0 0
          %921 = vmatpush.bf16.msra.mxu0 0
          %922 = vmatpush.bf16.msra.mxu0 0
          %923 = vmatpush.bf16.msra.mxu0 0
          %924 = vmatpush.bf16.msra.mxu0 %v913
          %925 = vmatpush.bf16.msra.mxu0 %v912
          %926 = vmatmul.bf16.gmra.mxu0 %v916
          %v927 = vpop.f32.mrf.mxu0
          %v928 = vadd.f32 %v902, %v927
          %v929 = vpop.f32.mrf.mxu0
          %930 = vdwg.mxu0
          %v931 = vadd.f32 %v557, %v928
          %932 = vst.msk [vmem:[#allocation2] sm:$0xff] %vm560, %v931
          %v933 = vld [vmem:[%s8] sm:$0x1]
          %v934 = vld [vmem:[%s9] sm:$0x1]
          %v935 = vsel %vm560, %v931, 0.0
          %936 = vadd.xlane.f32.xlu0 %v935
          %v937 = vpop.xlane.xlu0 %936
          %v938 = vmul.f32 %v937, %v570
          %v939 = vsub.f32 %v931, %v938
          %v940 = vmul.f32 %v939, %v939
          %v941 = vsel %vm560, %v940, 0.0
          %942 = vadd.xlane.f32.xlu0 %v941
          %v943 = vpop.xlane.xlu0 %942
          %v944 = vmul.f32 %v943, %v570
          %v945 = vadd.f32 %v944, 1e-06
          %v946 = vrsqrt.pop %v945
          %v947 = vmul.f32 %v946, %v945
          %v948 = vmul.f32 %v947, %v946
          %v949 = vmul.f32 0.5, %v948
          %v950 = vsub.f32 1.5, %v949
          %v951 = vmul.f32 %v946, %v950
          %vm952 = vweird.f32 %v945
          %vm953 = vweird.f32 %v946
          %vm954 = vmor %vm952, %vm953
          %v955 = vsel %vm954, %v946, %v951
          %v956 = vmul.f32 %v939, %v955
          %v958 = vperm.slane %v933, 0
          %v960 = vmul.f32 %v956, %v958
          %v962 = vperm.slane %v934, 0
          %v964 = vadd.f32 %v960, %v962
          %v965 = vpack.c.bf16 %v964, %v964
          %vm966 = vcmask 257024
          %967 = vst.msk [vmem:[#allocation3] sm:$0xf] %vm966, %v965
        $region88: #{tpu_custom_call.1} parent=75 // pred_fallthru
          _
        %v968 = vld [vmem:[#allocation3] sm:$0xf]
        %v969 = vld [vmem:[#allocation8] sm:$0xf]
        %v970 = vld [vmem:[#allocation8 + $0x4] sm:$0xf]
        %v971 = vld [vmem:[#allocation8 + $0x8] sm:$0xf]
        %v972 = vld [vmem:[#allocation8 + $0xc] sm:$0xf]
        %v973 = vld [vmem:[%s543] sm:$0x1]
        %v975 = vperm.slane %v973, 0
        %v981 = vunpack.c.l.b16 %v969
        %v982 = vunpack.c.l.b16 %v970
        %v983 = vunpack.c.l.b16 %v971
        %v984 = vunpack.c.l.b16 %v972
        %v985 = vpack.c.b16 %v982, %v981
        %v986 = vpack.c.b16 %v984, %v983
        %vm989 = vcmask 261120
        %v991 = vsel %vm989, %v968, 0
        %993 = vmatpush.bf16.msra.mxu0 0
        %994 = vmatpush.bf16.msra.mxu0 0
        %995 = vmatpush.bf16.msra.mxu0 0
        %996 = vmatpush.bf16.msra.mxu0 0
        %997 = vmatpush.bf16.msra.mxu0 0
        %998 = vmatpush.bf16.msra.mxu0 0
        %999 = vmatpush.bf16.msra.mxu0 %v986
        %1000 = vmatpush.bf16.msra.mxu0 %v985
        %1001 = vmatmul.bf16.gmra.mxu0 %v991
        %v1002 = vpop.f32.mrf.mxu0
        %v1003 = vadd.f32 %v975, %v1002
        %v1004 = vpop.f32.mrf.mxu0
        %1005 = vdwg.mxu0
        %v1006 = vmul.f32 %v1003, 0.5
        %v1007 = vmul.f32 %v1003, 0.044715
        %v1008 = vmul.f32 %v1007, %v1003
        %v1009 = vmul.f32 %v1008, %v1003
        %v1010 = vadd.f32 %v1003, %v1009
        %v1011 = vmul.f32 %v1010, 0.7978846
        %v1012 = vtanh.pop %v1011
        %v1013 = vadd.f32 %v1012, 1.0
        %v1014 = vmul.f32 %v1006, %v1013
        %v1015 = vpack.c.bf16 %v1014, %v1014
        %v1016 = vld [vmem:[%s548] sm:$0xf]
        %v1017 = vld [vmem:[%s548 + $0x4] sm:$0xf]
        %v1018 = vld [vmem:[%s548 + $0x8] sm:$0xf]
        %v1019 = vld [vmem:[%s548 + $0xc] sm:$0xf]
        %v1020 = vld [vmem:[%s548 + $0x10] sm:$0xf]
        %v1021 = vld [vmem:[%s548 + $0x14] sm:$0xf]
        %v1022 = vld [vmem:[%s548 + $0x18] sm:$0xf]
        %v1023 = vld [vmem:[%s548 + $0x1c] sm:$0xf]
        %v1032 = vunpack.c.l.b16 %v1016
        %v1033 = vunpack.c.l.b16 %v1017
        %v1034 = vunpack.c.l.b16 %v1018
        %v1035 = vunpack.c.l.b16 %v1019
        %v1036 = vunpack.c.l.b16 %v1020
        %v1037 = vunpack.c.l.b16 %v1021
        %v1038 = vunpack.c.l.b16 %v1022
        %v1039 = vunpack.c.l.b16 %v1023
        %v1040 = vpack.c.b16 %v1033, %v1032
        %v1041 = vpack.c.b16 %v1035, %v1034
        %v1042 = vpack.c.b16 %v1037, %v1036
        %v1043 = vpack.c.b16 %v1039, %v1038
        %vm1048 = vcmask 523264
        %v1050 = vsel %vm1048, %v1015, 0
        %1052 = vmatpush.bf16.msra.mxu0 0
        %1053 = vmatpush.bf16.msra.mxu0 0
        %1054 = vmatpush.bf16.msra.mxu0 0
        %1055 = vmatpush.bf16.msra.mxu0 0
        %1056 = vmatpush.bf16.msra.mxu0 %v1043
        %1057 = vmatpush.bf16.msra.mxu0 %v1042
        %1058 = vmatpush.bf16.msra.mxu0 %v1041
        %1059 = vmatpush.bf16.msra.mxu0 %v1040
        %1060 = vmatmul.bf16.gmra.mxu0 %v1050
        %v1061 = vpop.f32.mrf.mxu0
        %v1062 = vadd.f32 0.0, %v1061
        %v1063 = vpop.f32.mrf.mxu0
        %1064 = vdwg.mxu0
        // Predicated region
        $region89: #{tpu_custom_call.1} parent=75 // pred_check
          %p1065 = pneg %p551
        $region90: #{tpu_custom_call.1} parent=75 // pred_check_branch
          %1067 = sbr.rel (%p1065) target = $region92
        $region91: #{tpu_custom_call.1} parent=75 // pred_region
          %1068 = vst.msk [vmem:[#allocation4] sm:$0xff] %vm989, %v1062
        $region92: #{tpu_custom_call.1} parent=75 // pred_fallthru
          _
        %p1069 = scmp.gt.s32.totalorder %s35, 0
        // Predicated region
        $region93: #{tpu_custom_call.1} parent=75 // pred_check
          %p1070 = pneg %p1069
        $region94: #{tpu_custom_call.1} parent=75 // pred_check_branch
          %1072 = sbr.rel (%p1070) target = $region96
        $region95: #{tpu_custom_call.1} parent=75 // pred_region
          %v1073 = vld [vmem:[#allocation4] sm:$0xff]
          %v1074 = vadd.f32 %v1073, %v1062
          %1075 = vst.msk [vmem:[#allocation4] sm:$0xff] %vm989, %v1074
        $region96: #{tpu_custom_call.1} parent=75 // pred_fallthru
          _
        // Predicated region
        $region97: #{tpu_custom_call.1} parent=75 // pred_check
          %p1076 = pneg %p551
        $region98: #{tpu_custom_call.1} parent=75 // pred_check_branch
          %1078 = sbr.rel (%p1076) target = $region100
        $region99: #{tpu_custom_call.1} parent=75 // pred_region
          %v1079 = vld [vmem:[#allocation2] sm:$0xff]
          %v1080 = vld [vmem:[#allocation4] sm:$0xff]
          %v1081 = vadd.f32 %v1079, %v1080
          %v1082 = vld [vmem:[%s13] sm:$0x1]
          %v1084 = vperm.slane %v1082, 0
          %v1086 = vadd.f32 %v1081, %v1084
          %1087 = vst.msk [vmem:[%s536] sm:$0xff] %vm989, %v1086
        $region100: #{tpu_custom_call.1} parent=75 // pred_fallthru
          _
        %s1088 = sand.u32 %s364, 1
        %s1089 = scalar_lea.sflag [#allocation7], %s1088
        %s1090 = sand.u32 %s364, 1
        %s1091 = smul.addr %s1090, 8
        %s1092 = scalar_lea.vmem [#allocation10], %s1091
        // Predicated region
        $region101: #{tpu_custom_call.1} parent=75 // pred_check
          %p1093 = pneg %p374
        $region102: #{tpu_custom_call.1} parent=75 // pred_check_branch
          %1095 = sbr.rel (%p1093) target = $region104
        $region103: #{tpu_custom_call.1} parent=75 // pred_region
          %1097 = vsyncadd %s1089, 0
          %s1098 = smul.addr %s34, 8
          %s1099 = scalar_lea.hbm %s14, %s1098
          %s1101 = sshll.u32 %s1092, 4
          %s1102 = int_to_ptr.vmem [resolvable:$true] %s1101
          %s1103 = sshll.u32 %s1099, 4
          %s1104 = int_to_ptr.hbm [resolvable:$true] %s1103
          %1106 = dma.vmem_to_hbm [thread:$0]  %s1102, 128, %s1104, %s1089
        $region104: #{tpu_custom_call.1} parent=75 // pred_fallthru
          _
      $region76: #{tpu_custom_call.1} parent=5 // pred_fallthru
        _
      %p1107 = scmp.le.s32.totalorder 2, %s25
      // Predicated region
      $region105: #{tpu_custom_call.1} parent=5 // pred_check
        %p1108 = pneg %p1107
      $region106: #{tpu_custom_call.1} parent=5 // pred_check_branch
        %1110 = sbr.rel (%p1108) target = $region108
      $region107: #{tpu_custom_call.1} parent=5 // pred_region
        %s1111 = ssub.s32 %s25, 2
        // Predicated region
        $region109: #{tpu_custom_call.1} parent=107 // pred_check
          %p1112 = pneg %p380
        $region110: #{tpu_custom_call.1} parent=107 // pred_check_branch
          %1114 = sbr.rel (%p1112) target = $region112
        $region111: #{tpu_custom_call.1} parent=107 // pred_region
          %s1115 = sand.u32 %s365, 1
          %s1116 = scalar_lea.sflag [#allocation7], %s1115
          %s1117 = sand.u32 %s365, 1
          %s1118 = smul.addr %s1117, 8
          %s1119 = scalar_lea.vmem [#allocation10], %s1118
          %1121 = dma.done %s1116, 128
        $region112: #{tpu_custom_call.1} parent=107 // pred_fallthru
          _
      $region108: #{tpu_custom_call.1} parent=5 // pred_fallthru
        _
    $region6: #{tpu_custom_call.1} parent=1 // loop_footer
      %s29 = sadd.s32 1, %s25
    $region7: #{tpu_custom_call.1} parent=1 // loop_footer_branch
      %24 = sbr.rel target = $region3
    $region8: #{tpu_custom_call.1} parent=1 // loop_exit
      _
    %1122 = vsyncpa [#allocation6], 1
    %s1123 = scalar_lea.sflag [#allocation6], 1
    %1124 = vsyncpa %s1123, 1
    %1125 = vsyncpa [#allocation9], 1
    %1126 = vsyncpa [#allocation7], 1
    %s1127 = scalar_lea.sflag [#allocation7], 1
    %1128 = vsyncpa %s1127, 1

</llo_original>
